<compile_context>
chip_gen: v6e
topology: v6e:2x2x1
jax: 0.10.0
libtpu: 0.0.40
codegen_flags: <defaults>
</compile_context>

<pallas_src>
import functools

import jax
import jax.numpy as jnp
from jax.experimental import pallas as pl
from jax.experimental.pallas import tpu as pltpu


def _attention_kernel(x_ref, pose_ref, wq_ref, wk_ref, wv_ref, wp_ref, bp_ref,
                      o_ref, *, num_heads, head_dim, block_b, seq_len):
    C = num_heads * head_dim
    Bt, N, H, D = block_b, seq_len, num_heads, head_dim

    # Flatten the per-step batch into the matmul M dimension so the
    # projections run as a few larger MXU passes (leading-dim reshape: free).
    x2 = x_ref[...].reshape(Bt * N, C)       # (Bt*N, C)
    p2 = pose_ref[...].reshape(Bt * N, C)    # (Bt*N, C)

    # Projections (qkv_bias=False).  The 1/sqrt(D) softmax scale is already
    # folded into Wq at the wrapper, so no extra VALU multiply here.
    q2 = jnp.dot(p2, wq_ref[...], preferred_element_type=jnp.float32)  # (Bt*N, C)
    k2 = jnp.dot(x2, wk_ref[...], preferred_element_type=jnp.float32)  # (Bt*N, C)
    v2 = jnp.dot(x2, wv_ref[...], preferred_element_type=jnp.float32)  # (Bt*N, C)

    # Unflatten the leading dim only (free); heads stay as static lane slices
    # so no 3-D/4-D transposes are needed.
    q3 = q2.reshape(Bt, N, C)
    k3 = k2.reshape(Bt, N, C)
    v3 = v2.reshape(Bt, N, C)

    # Per-head attention, batched over the Bt batch elements in one einsum
    # (validated 'bnd,bmd->bnm' pattern).  H is tiny here, so a static unroll
    # is fine; for large H move heads onto a grid axis / lax.fori_loop.
    head_outs = []
    for h in range(H):
        cols = slice(h * D, (h + 1) * D)
        qh = q3[:, :, cols]                  # (Bt, N, D)
        kh = k3[:, :, cols]
        vh = v3[:, :, cols]

        logits = jnp.einsum('bnd,bmd->bnm', qh, kh,
                            preferred_element_type=jnp.float32)  # (Bt, N, N)
        m = jnp.max(logits, axis=-1, keepdims=True)
        p = jnp.exp(logits - m)
        denom = jnp.sum(p, axis=-1, keepdims=True)
        # EUP approximate reciprocal instead of a VALU divide.
        p = p * pl.reciprocal(denom, approx=True)
        # attn_drop ratio 0.0 -> identity.

        oh = jnp.einsum('bnm,bmd->bnd', p, vh,
                        preferred_element_type=jnp.float32)      # (Bt, N, D)
        head_outs.append(oh)

    # Assemble all heads once (lane concat), then a single big output
    # projection + single bias add instead of H accumulated (N, D)@(D, C)
    # matmuls and per-b bias adds.
    out = jnp.concatenate(head_outs, axis=-1)        # (Bt, N, C)
    out2 = out.reshape(Bt * N, C)
    proj = jnp.dot(out2, wp_ref[...],
                   preferred_element_type=jnp.float32) + bp_ref[...]  # (Bt*N, C)
    # proj_drop ratio 0.0 -> identity.

    # One whole-block store (no per-row masked stores in a Python loop).
    o_ref[...] = proj.reshape(Bt, N, C).astype(o_ref.dtype)


def attention_forward(x, pose, wq, wk, wv, wp, bp, *, num_heads, block_b=None):
    B, N, C = x.shape
    assert C % num_heads == 0
    head_dim = C // num_heads
    scale = head_dim ** (-0.5)

    # Fold the softmax scale into the (constant) Wq weight instead of scaling
    # q inside the kernel every step.
    wq_scaled = wq * scale
    bp2 = bp.reshape(1, C)

    if block_b is None:
        # grid=(1,) by default: on single-TC v5e/v6e a multi-step "parallel"
        # grid just serializes with extra per-step overhead, and at these tiny
        # shapes v7x's second TensorCore cannot hide the step overhead either.
        # For large B on v7x, pass block_b=B//2 to use both cores.
        block_b = B
    assert B % block_b == 0, "block_b must divide B"
    grid_b = B // block_b

    kernel = functools.partial(
        _attention_kernel,
        num_heads=num_heads, head_dim=head_dim,
        block_b=block_b, seq_len=N)

    batch_block = lambda i: (i, 0, 0)
    whole = lambda i: (0, 0)

    return pl.pallas_call(
        kernel,
        out_shape=jax.ShapeDtypeStruct((B, N, C), x.dtype),
        grid_spec=pltpu.PrefetchScalarGridSpec(
            num_scalar_prefetch=0,
            grid=(grid_b,),
            in_specs=[
                pl.BlockSpec((block_b, N, C), batch_block),   # x
                pl.BlockSpec((block_b, N, C), batch_block),   # pose
                pl.BlockSpec((C, C), whole),                  # Wq (scale folded in)
                pl.BlockSpec((C, C), whole),                  # Wk
                pl.BlockSpec((C, C), whole),                  # Wv
                pl.BlockSpec((C, C), whole),                  # Wproj
                pl.BlockSpec((1, C), whole),                  # bproj
            ],
            out_specs=pl.BlockSpec((block_b, N, C), batch_block),
        ),
        # NOTE: blocks are tiny here.  For production N/C: raise
        # vmem_limit_bytes, single-buffer the constant weight specs
        # (pipeline_mode=pl.Buffered(1)), cast matmul operands to bf16 on
        # v6e/v7x, and tile K/V flash-style (size for v7x's 64 MiB VMEM first).
        compiler_params=pltpu.CompilerParams(
            dimension_semantics=("parallel",)),
    )(x, pose, wq_scaled, wk, wv, wp, bp2)


def attention_reference(x, pose, wq, wk, wv, wp, bp, *, num_heads):
    B, N, C = x.shape
    D = C // num_heads
    scale = D ** (-0.5)
    q = (pose @ wq).reshape(B, N, num_heads, D).transpose(0, 2, 1, 3)
    k = (x @ wk).reshape(B, N, num_heads, D).transpose(0, 2, 1, 3)
    v = (x @ wv).reshape(B, N, num_heads, D).transpose(0, 2, 1, 3)
    attn = jnp.einsum('bhnd,bhmd->bhnm', q, k) * scale
    attn = jax.nn.softmax(attn, axis=-1)
    out = jnp.einsum('bhnm,bhmd->bhnd', attn, v)
    out = out.transpose(0, 2, 1, 3).reshape(B, N, C)
    return out @ wp + bp


if __name__ == "__main__":
    B, N, C, H = 2, 8, 32, 4   # dim=32, num_heads=4, head_dim=8

    key = jax.random.PRNGKey(0)
    kx, kp, k1, k2, k3, k4, k5 = jax.random.split(key, 7)
    x = jax.random.normal(kx, (B, N, C), dtype=jnp.float32)
    pose = jax.random.normal(kp, (B, N, C), dtype=jnp.float32)

    w_scale = 1.0 / (C ** 0.5)
    wq = jax.random.normal(k1, (C, C), dtype=jnp.float32) * w_scale
    wk = jax.random.normal(k2, (C, C), dtype=jnp.float32) * w_scale
    wv = jax.random.normal(k3, (C, C), dtype=jnp.float32) * w_scale
    wp = jax.random.normal(k4, (C, C), dtype=jnp.float32) * w_scale
    bp = jax.random.normal(k5, (C,), dtype=jnp.float32) * 0.1

    out = attention_forward(x, pose, wq, wk, wv, wp, bp, num_heads=H)
    out = jax.block_until_ready(out)

    ref = attention_reference(x, pose, wq, wk, wv, wp, bp, num_heads=H)
    assert out.shape == (B, N, C)
    # Tolerance relaxed vs. 1e-4 because the softmax denominator uses the EUP
    # approximate reciprocal; real bugs produce O(0.1-1) errors.
    assert jnp.allclose(out, ref, atol=1e-2, rtol=1e-2), "mismatch vs reference"
    print("KERNEL_OK")
</pallas_src>

<mosaic_0001>
module attributes {stable_mosaic.version = 11 : i64} {
  func.func @_attention_kernel(%arg0: i32, %arg1: memref<2x8x32xf32, #tpu.memory_space<vmem>>, %arg2: memref<2x8x32xf32, #tpu.memory_space<vmem>>, %arg3: memref<32x32xf32, #tpu.memory_space<vmem>>, %arg4: memref<32x32xf32, #tpu.memory_space<vmem>>, %arg5: memref<32x32xf32, #tpu.memory_space<vmem>>, %arg6: memref<32x32xf32, #tpu.memory_space<vmem>>, %arg7: memref<1x32xf32, #tpu.memory_space<vmem>>, %arg8: memref<2x8x32xf32, #tpu.memory_space<vmem>>) attributes {dimension_semantics = [#tpu.dimension_semantics<parallel>], iteration_bounds = array<i64: 1>, scalar_prefetch = 0 : i64, scratch_operands = 0 : i64, tpu.core_type = #tpu.core_type<tc>, window_params = [{transform_indices = @transform_0, window_bounds = array<i64: 2, 8, 32>}, {transform_indices = @transform_1, window_bounds = array<i64: 2, 8, 32>}, {pipeline_mode = #tpu.pipeline_mode<synchronous>, transform_indices = @transform_2, window_bounds = array<i64: 32, 32>}, {pipeline_mode = #tpu.pipeline_mode<synchronous>, transform_indices = @transform_3, window_bounds = array<i64: 32, 32>}, {pipeline_mode = #tpu.pipeline_mode<synchronous>, transform_indices = @transform_4, window_bounds = array<i64: 32, 32>}, {pipeline_mode = #tpu.pipeline_mode<synchronous>, transform_indices = @transform_5, window_bounds = array<i64: 32, 32>}, {pipeline_mode = #tpu.pipeline_mode<synchronous>, transform_indices = @transform_6, window_bounds = array<i64: 1, 32>}, {transform_indices = @transform_7, window_bounds = array<i64: 2, 8, 32>}]} {
    %c0 = arith.constant 0 : index
    %c0_0 = arith.constant 0 : index
    %c0_1 = arith.constant 0 : index
    %0 = vector.load %arg1[%c0, %c0_0, %c0_1] : memref<2x8x32xf32, #tpu.memory_space<vmem>>, vector<2x8x32xf32>
    %1 = vector.shape_cast %0 : vector<2x8x32xf32> to vector<16x32xf32>
    %c0_2 = arith.constant 0 : index
    %c0_3 = arith.constant 0 : index
    %c0_4 = arith.constant 0 : index
    %2 = vector.load %arg2[%c0_2, %c0_3, %c0_4] : memref<2x8x32xf32, #tpu.memory_space<vmem>>, vector<2x8x32xf32>
    %3 = vector.shape_cast %2 : vector<2x8x32xf32> to vector<16x32xf32>
    %c0_5 = arith.constant 0 : index
    %c0_6 = arith.constant 0 : index
    %4 = vector.load %arg3[%c0_5, %c0_6] : memref<32x32xf32, #tpu.memory_space<vmem>>, vector<32x32xf32>
    %cst = arith.constant dense<0.000000e+00> : vector<16x32xf32>
    %5 = tpu.matmul %3, %4, %cst {dimension_numbers = #tpu.dot_dimension_numbers<[1], [0], [0], [1], [0, 0, 1, 1], [], []>} : vector<16x32xf32>, vector<32x32xf32>, vector<16x32xf32> -> vector<16x32xf32>
    %c0_7 = arith.constant 0 : index
    %c0_8 = arith.constant 0 : index
    %6 = vector.load %arg4[%c0_7, %c0_8] : memref<32x32xf32, #tpu.memory_space<vmem>>, vector<32x32xf32>
    %cst_9 = arith.constant dense<0.000000e+00> : vector<16x32xf32>
    %7 = tpu.matmul %1, %6, %cst_9 {dimension_numbers = #tpu.dot_dimension_numbers<[1], [0], [0], [1], [0, 0, 1, 1], [], []>} : vector<16x32xf32>, vector<32x32xf32>, vector<16x32xf32> -> vector<16x32xf32>
    %c0_10 = arith.constant 0 : index
    %c0_11 = arith.constant 0 : index
    %8 = vector.load %arg5[%c0_10, %c0_11] : memref<32x32xf32, #tpu.memory_space<vmem>>, vector<32x32xf32>
    %cst_12 = arith.constant dense<0.000000e+00> : vector<16x32xf32>
    %9 = tpu.matmul %1, %8, %cst_12 {dimension_numbers = #tpu.dot_dimension_numbers<[1], [0], [0], [1], [0, 0, 1, 1], [], []>} : vector<16x32xf32>, vector<32x32xf32>, vector<16x32xf32> -> vector<16x32xf32>
    %10 = vector.shape_cast %5 : vector<16x32xf32> to vector<2x8x32xf32>
    %11 = vector.shape_cast %7 : vector<16x32xf32> to vector<2x8x32xf32>
    %12 = vector.shape_cast %9 : vector<16x32xf32> to vector<2x8x32xf32>
    %13 = vector.extract_strided_slice %10 {offsets = [0, 0, 0], sizes = [2, 8, 8], strides = [1, 1, 1]} : vector<2x8x32xf32> to vector<2x8x8xf32>
    %14 = vector.extract_strided_slice %11 {offsets = [0, 0, 0], sizes = [2, 8, 8], strides = [1, 1, 1]} : vector<2x8x32xf32> to vector<2x8x8xf32>
    %15 = vector.extract_strided_slice %12 {offsets = [0, 0, 0], sizes = [2, 8, 8], strides = [1, 1, 1]} : vector<2x8x32xf32> to vector<2x8x8xf32>
    "tpu.trace_start"() <{level = 10 : i32, message = "bnd,bmd->bnm"}> : () -> ()
    %cst_13 = arith.constant dense<0.000000e+00> : vector<2x8x8xf32>
    %16 = tpu.matmul %13, %14, %cst_13 {dimension_numbers = #tpu.dot_dimension_numbers<[2], [2], [1], [1], [0, 0, 0, 1, 1, 1], [0], [0]>} : vector<2x8x8xf32>, vector<2x8x8xf32>, vector<2x8x8xf32> -> vector<2x8x8xf32>
    "tpu.trace_stop"() : () -> ()
    %cst_14 = arith.constant dense<0xFF800000> : vector<2x8xf32>
    %17 = vector.multi_reduction <maximumf>, %16, %cst_14 [2] : vector<2x8x8xf32> to vector<2x8xf32>
    %18 = vector.shape_cast %17 : vector<2x8xf32> to vector<2x8x1xf32>
    %19 = vector.broadcast %18 : vector<2x8x1xf32> to vector<2x8x8xf32>
    %20 = arith.subf %16, %19 : vector<2x8x8xf32>
    %21 = math.exp %20 : vector<2x8x8xf32>
    %cst_15 = arith.constant dense<0.000000e+00> : vector<2x8xf32>
    %22 = vector.multi_reduction <add>, %21, %cst_15 [2] : vector<2x8x8xf32> to vector<2x8xf32>
    %23 = vector.shape_cast %22 : vector<2x8xf32> to vector<2x8x1xf32>
    %24 = tpu.reciprocal %23 {approx = true} : vector<2x8x1xf32> -> vector<2x8x1xf32>
    %25 = vector.broadcast %24 : vector<2x8x1xf32> to vector<2x8x8xf32>
    %26 = arith.mulf %21, %25 : vector<2x8x8xf32>
    "tpu.trace_start"() <{level = 10 : i32, message = "bnm,bmd->bnd"}> : () -> ()
    %cst_16 = arith.constant dense<0.000000e+00> : vector<2x8x8xf32>
    %27 = tpu.matmul %26, %15, %cst_16 {dimension_numbers = #tpu.dot_dimension_numbers<[2], [1], [1], [2], [0, 0, 0, 1, 1, 2], [0], [0]>} : vector<2x8x8xf32>, vector<2x8x8xf32>, vector<2x8x8xf32> -> vector<2x8x8xf32>
    "tpu.trace_stop"() : () -> ()
    %28 = vector.extract_strided_slice %10 {offsets = [0, 0, 8], sizes = [2, 8, 8], strides = [1, 1, 1]} : vector<2x8x32xf32> to vector<2x8x8xf32>
    %29 = vector.extract_strided_slice %11 {offsets = [0, 0, 8], sizes = [2, 8, 8], strides = [1, 1, 1]} : vector<2x8x32xf32> to vector<2x8x8xf32>
    %30 = vector.extract_strided_slice %12 {offsets = [0, 0, 8], sizes = [2, 8, 8], strides = [1, 1, 1]} : vector<2x8x32xf32> to vector<2x8x8xf32>
    "tpu.trace_start"() <{level = 10 : i32, message = "bnd,bmd->bnm"}> : () -> ()
    %cst_17 = arith.constant dense<0.000000e+00> : vector<2x8x8xf32>
    %31 = tpu.matmul %28, %29, %cst_17 {dimension_numbers = #tpu.dot_dimension_numbers<[2], [2], [1], [1], [0, 0, 0, 1, 1, 1], [0], [0]>} : vector<2x8x8xf32>, vector<2x8x8xf32>, vector<2x8x8xf32> -> vector<2x8x8xf32>
    "tpu.trace_stop"() : () -> ()
    %cst_18 = arith.constant dense<0xFF800000> : vector<2x8xf32>
    %32 = vector.multi_reduction <maximumf>, %31, %cst_18 [2] : vector<2x8x8xf32> to vector<2x8xf32>
    %33 = vector.shape_cast %32 : vector<2x8xf32> to vector<2x8x1xf32>
    %34 = vector.broadcast %33 : vector<2x8x1xf32> to vector<2x8x8xf32>
    %35 = arith.subf %31, %34 : vector<2x8x8xf32>
    %36 = math.exp %35 : vector<2x8x8xf32>
    %cst_19 = arith.constant dense<0.000000e+00> : vector<2x8xf32>
    %37 = vector.multi_reduction <add>, %36, %cst_19 [2] : vector<2x8x8xf32> to vector<2x8xf32>
    %38 = vector.shape_cast %37 : vector<2x8xf32> to vector<2x8x1xf32>
    %39 = tpu.reciprocal %38 {approx = true} : vector<2x8x1xf32> -> vector<2x8x1xf32>
    %40 = vector.broadcast %39 : vector<2x8x1xf32> to vector<2x8x8xf32>
    %41 = arith.mulf %36, %40 : vector<2x8x8xf32>
    "tpu.trace_start"() <{level = 10 : i32, message = "bnm,bmd->bnd"}> : () -> ()
    %cst_20 = arith.constant dense<0.000000e+00> : vector<2x8x8xf32>
    %42 = tpu.matmul %41, %30, %cst_20 {dimension_numbers = #tpu.dot_dimension_numbers<[2], [1], [1], [2], [0, 0, 0, 1, 1, 2], [0], [0]>} : vector<2x8x8xf32>, vector<2x8x8xf32>, vector<2x8x8xf32> -> vector<2x8x8xf32>
    "tpu.trace_stop"() : () -> ()
    %43 = vector.extract_strided_slice %10 {offsets = [0, 0, 16], sizes = [2, 8, 8], strides = [1, 1, 1]} : vector<2x8x32xf32> to vector<2x8x8xf32>
    %44 = vector.extract_strided_slice %11 {offsets = [0, 0, 16], sizes = [2, 8, 8], strides = [1, 1, 1]} : vector<2x8x32xf32> to vector<2x8x8xf32>
    %45 = vector.extract_strided_slice %12 {offsets = [0, 0, 16], sizes = [2, 8, 8], strides = [1, 1, 1]} : vector<2x8x32xf32> to vector<2x8x8xf32>
    "tpu.trace_start"() <{level = 10 : i32, message = "bnd,bmd->bnm"}> : () -> ()
    %cst_21 = arith.constant dense<0.000000e+00> : vector<2x8x8xf32>
    %46 = tpu.matmul %43, %44, %cst_21 {dimension_numbers = #tpu.dot_dimension_numbers<[2], [2], [1], [1], [0, 0, 0, 1, 1, 1], [0], [0]>} : vector<2x8x8xf32>, vector<2x8x8xf32>, vector<2x8x8xf32> -> vector<2x8x8xf32>
    "tpu.trace_stop"() : () -> ()
    %cst_22 = arith.constant dense<0xFF800000> : vector<2x8xf32>
    %47 = vector.multi_reduction <maximumf>, %46, %cst_22 [2] : vector<2x8x8xf32> to vector<2x8xf32>
    %48 = vector.shape_cast %47 : vector<2x8xf32> to vector<2x8x1xf32>
    %49 = vector.broadcast %48 : vector<2x8x1xf32> to vector<2x8x8xf32>
    %50 = arith.subf %46, %49 : vector<2x8x8xf32>
    %51 = math.exp %50 : vector<2x8x8xf32>
    %cst_23 = arith.constant dense<0.000000e+00> : vector<2x8xf32>
    %52 = vector.multi_reduction <add>, %51, %cst_23 [2] : vector<2x8x8xf32> to vector<2x8xf32>
    %53 = vector.shape_cast %52 : vector<2x8xf32> to vector<2x8x1xf32>
    %54 = tpu.reciprocal %53 {approx = true} : vector<2x8x1xf32> -> vector<2x8x1xf32>
    %55 = vector.broadcast %54 : vector<2x8x1xf32> to vector<2x8x8xf32>
    %56 = arith.mulf %51, %55 : vector<2x8x8xf32>
    "tpu.trace_start"() <{level = 10 : i32, message = "bnm,bmd->bnd"}> : () -> ()
    %cst_24 = arith.constant dense<0.000000e+00> : vector<2x8x8xf32>
    %57 = tpu.matmul %56, %45, %cst_24 {dimension_numbers = #tpu.dot_dimension_numbers<[2], [1], [1], [2], [0, 0, 0, 1, 1, 2], [0], [0]>} : vector<2x8x8xf32>, vector<2x8x8xf32>, vector<2x8x8xf32> -> vector<2x8x8xf32>
    "tpu.trace_stop"() : () -> ()
    %58 = vector.extract_strided_slice %10 {offsets = [0, 0, 24], sizes = [2, 8, 8], strides = [1, 1, 1]} : vector<2x8x32xf32> to vector<2x8x8xf32>
    %59 = vector.extract_strided_slice %11 {offsets = [0, 0, 24], sizes = [2, 8, 8], strides = [1, 1, 1]} : vector<2x8x32xf32> to vector<2x8x8xf32>
    %60 = vector.extract_strided_slice %12 {offsets = [0, 0, 24], sizes = [2, 8, 8], strides = [1, 1, 1]} : vector<2x8x32xf32> to vector<2x8x8xf32>
    "tpu.trace_start"() <{level = 10 : i32, message = "bnd,bmd->bnm"}> : () -> ()
    %cst_25 = arith.constant dense<0.000000e+00> : vector<2x8x8xf32>
    %61 = tpu.matmul %58, %59, %cst_25 {dimension_numbers = #tpu.dot_dimension_numbers<[2], [2], [1], [1], [0, 0, 0, 1, 1, 1], [0], [0]>} : vector<2x8x8xf32>, vector<2x8x8xf32>, vector<2x8x8xf32> -> vector<2x8x8xf32>
    "tpu.trace_stop"() : () -> ()
    %cst_26 = arith.constant dense<0xFF800000> : vector<2x8xf32>
    %62 = vector.multi_reduction <maximumf>, %61, %cst_26 [2] : vector<2x8x8xf32> to vector<2x8xf32>
    %63 = vector.shape_cast %62 : vector<2x8xf32> to vector<2x8x1xf32>
    %64 = vector.broadcast %63 : vector<2x8x1xf32> to vector<2x8x8xf32>
    %65 = arith.subf %61, %64 : vector<2x8x8xf32>
    %66 = math.exp %65 : vector<2x8x8xf32>
    %cst_27 = arith.constant dense<0.000000e+00> : vector<2x8xf32>
    %67 = vector.multi_reduction <add>, %66, %cst_27 [2] : vector<2x8x8xf32> to vector<2x8xf32>
    %68 = vector.shape_cast %67 : vector<2x8xf32> to vector<2x8x1xf32>
    %69 = tpu.reciprocal %68 {approx = true} : vector<2x8x1xf32> -> vector<2x8x1xf32>
    %70 = vector.broadcast %69 : vector<2x8x1xf32> to vector<2x8x8xf32>
    %71 = arith.mulf %66, %70 : vector<2x8x8xf32>
    "tpu.trace_start"() <{level = 10 : i32, message = "bnm,bmd->bnd"}> : () -> ()
    %cst_28 = arith.constant dense<0.000000e+00> : vector<2x8x8xf32>
    %72 = tpu.matmul %71, %60, %cst_28 {dimension_numbers = #tpu.dot_dimension_numbers<[2], [1], [1], [2], [0, 0, 0, 1, 1, 2], [0], [0]>} : vector<2x8x8xf32>, vector<2x8x8xf32>, vector<2x8x8xf32> -> vector<2x8x8xf32>
    "tpu.trace_stop"() : () -> ()
    %73 = tpu.concatenate %27, %42, %57, %72 in 2 : vector<2x8x8xf32>, vector<2x8x8xf32>, vector<2x8x8xf32>, vector<2x8x8xf32> -> vector<2x8x32xf32>
    %74 = vector.shape_cast %73 : vector<2x8x32xf32> to vector<16x32xf32>
    %c0_29 = arith.constant 0 : index
    %c0_30 = arith.constant 0 : index
    %75 = vector.load %arg6[%c0_29, %c0_30] : memref<32x32xf32, #tpu.memory_space<vmem>>, vector<32x32xf32>
    %cst_31 = arith.constant dense<0.000000e+00> : vector<16x32xf32>
    %76 = tpu.matmul %74, %75, %cst_31 {dimension_numbers = #tpu.dot_dimension_numbers<[1], [0], [0], [1], [0, 0, 1, 1], [], []>} : vector<16x32xf32>, vector<32x32xf32>, vector<16x32xf32> -> vector<16x32xf32>
    %c0_32 = arith.constant 0 : index
    %c0_33 = arith.constant 0 : index
    %77 = vector.load %arg7[%c0_32, %c0_33] : memref<1x32xf32, #tpu.memory_space<vmem>>, vector<1x32xf32>
    %78 = vector.broadcast %77 : vector<1x32xf32> to vector<16x32xf32>
    %79 = arith.addf %76, %78 : vector<16x32xf32>
    %80 = vector.shape_cast %79 : vector<16x32xf32> to vector<2x8x32xf32>
    %c0_34 = arith.constant 0 : index
    %c0_35 = arith.constant 0 : index
    %c0_36 = arith.constant 0 : index
    %81 = vector.load %arg8[%c0_34, %c0_35, %c0_36] : memref<2x8x32xf32, #tpu.memory_space<vmem>>, vector<2x8x32xf32>
    tpu.vector_store %arg8[%c0_34, %c0_35, %c0_36], %80 {strides = array<i32>} : memref<2x8x32xf32, #tpu.memory_space<vmem>>, vector<2x8x32xf32>,
    return
  }
  func.func @transform_0(%arg0: i32) -> (i32, i32, i32) {
    %c0_i32 = arith.constant 0 : i32
    %c0_i32_0 = arith.constant 0 : i32
    %c0_i32_1 = arith.constant 0 : i32
    return %arg0, %c0_i32, %c0_i32_0 : i32, i32, i32
  }
  func.func @transform_1(%arg0: i32) -> (i32, i32, i32) {
    %c0_i32 = arith.constant 0 : i32
    %c0_i32_0 = arith.constant 0 : i32
    %c0_i32_1 = arith.constant 0 : i32
    return %arg0, %c0_i32, %c0_i32_0 : i32, i32, i32
  }
  func.func @transform_2(%arg0: i32) -> (i32, i32) {
    %c0_i32 = arith.constant 0 : i32
    %c0_i32_0 = arith.constant 0 : i32
    %c0_i32_1 = arith.constant 0 : i32
    return %c0_i32, %c0_i32_0 : i32, i32
  }
  func.func @transform_3(%arg0: i32) -> (i32, i32) {
    %c0_i32 = arith.constant 0 : i32
    %c0_i32_0 = arith.constant 0 : i32
    %c0_i32_1 = arith.constant 0 : i32
    return %c0_i32, %c0_i32_0 : i32, i32
  }
  func.func @transform_4(%arg0: i32) -> (i32, i32) {
    %c0_i32 = arith.constant 0 : i32
    %c0_i32_0 = arith.constant 0 : i32
    %c0_i32_1 = arith.constant 0 : i32
    return %c0_i32, %c0_i32_0 : i32, i32
  }
  func.func @transform_5(%arg0: i32) -> (i32, i32) {
    %c0_i32 = arith.constant 0 : i32
    %c0_i32_0 = arith.constant 0 : i32
    %c0_i32_1 = arith.constant 0 : i32
    return %c0_i32, %c0_i32_0 : i32, i32
  }
  func.func @transform_6(%arg0: i32) -> (i32, i32) {
    %c0_i32 = arith.constant 0 : i32
    %c0_i32_0 = arith.constant 0 : i32
    %c0_i32_1 = arith.constant 0 : i32
    return %c0_i32, %c0_i32_0 : i32, i32
  }
  func.func @transform_7(%arg0: i32) -> (i32, i32, i32) {
    %c0_i32 = arith.constant 0 : i32
    %c0_i32_0 = arith.constant 0 : i32
    %c0_i32_1 = arith.constant 0 : i32
    return %arg0, %c0_i32, %c0_i32_0 : i32, i32, i32
  }
}

</mosaic_0001>

<llo_original>
// kernel: tpu_custom_call.1
$region0: #{tpu_custom_call.1}
  #allocation0 [shape = 'u32[]', space=smem, size = 0x4, offset = 0x4, fixed_abs, tag = 'smem constant byte address 0x4 - core index']
  #allocation1 [shape = 'u32[144,128]{1,0:T(1,128)}', space=vmem, size = 0x12000, scoped, tag = 'internal scratch']
  %s0 = inlined_call_operand.hbm [shape: f32[2,8,32], index: 0, kind: input, shape index: {}]
  %s1 = inlined_call_operand.hbm [shape: f32[2,8,32], index: 1, kind: input, shape index: {}]
  %s2 = inlined_call_operand.hbm [shape: f32[32,32], index: 2, kind: input, shape index: {}]
  %s3 = inlined_call_operand.hbm [shape: f32[32,32], index: 3, kind: input, shape index: {}]
  %s4 = inlined_call_operand.hbm [shape: f32[32,32], index: 4, kind: input, shape index: {}]
  %s5 = inlined_call_operand.hbm [shape: f32[32,32], index: 5, kind: input, shape index: {}]
  %s6 = inlined_call_operand.vmem [shape: f32[1,32], index: 6, kind: input, shape index: {}]
  %s7 = inlined_call_operand.hbm [shape: f32[2,8,32], index: 7, kind: output, shape index: {}]
  %s8 = sld [smem:[#allocation0]]
  $region62: #{tpu_custom_call.1} parent=0
    _
  %s10 = ssub.s32 1, %s8
  %s11 = scalar_select 0, %s10, %s8
  $region1: #{tpu_custom_call.1} parent=0
    #allocation2 [shape = 'u8[8192]{0}', space=vmem, size = 0x2000, scoped, tag = 'input window, operand 0, single buffered']
    #allocation3 [shape = 's32[1]{0}', space=sflag, size = 0x4, scoped, tag = 'scoped memory for tpu_custom_call.1']
    #allocation4 [shape = 's32[1]{0}', space=sflag, size = 0x4, scoped, tag = 'scoped memory for tpu_custom_call.1']
    #allocation5 [shape = 'u8[8192]{0}', space=vmem, size = 0x2000, scoped, tag = 'input window, operand 1, single buffered']
    #allocation6 [shape = 's32[1]{0}', space=sflag, size = 0x4, scoped, tag = 'scoped memory for tpu_custom_call.1']
    #allocation7 [shape = 'u8[16384]{0}', space=vmem, size = 0x4000, scoped, tag = 'input window, operand 2, single buffered']
    #allocation8 [shape = 'u8[16384]{0}', space=vmem, size = 0x4000, scoped, tag = 'input window, operand 3, single buffered']
    #allocation9 [shape = 's32[1]{0}', space=sflag, size = 0x4, scoped, tag = 'scoped memory for tpu_custom_call.1']
    #allocation10 [shape = 'u8[16384]{0}', space=vmem, size = 0x4000, scoped, tag = 'input window, operand 4, single buffered']
    #allocation11 [shape = 'u8[16384]{0}', space=vmem, size = 0x4000, scoped, tag = 'input window, operand 5, single buffered']
    #allocation12 [shape = 's32[1]{0}', space=sflag, size = 0x4, scoped, tag = 'scoped memory for tpu_custom_call.1']
    #allocation13 [shape = 'u8[8192]{0}', space=vmem, size = 0x2000, scoped, tag = 'output window, operand 0, single buffered']
    %12 = vsyncpa [#allocation3], 0
    %13 = vsyncpa [#allocation6], 0
    %14 = vsyncpa [#allocation9], 0
    %15 = vsyncpa [#allocation12], 0
    %16 = vsyncpa [#allocation4], 0
    // Predicated region
    $region2: #{tpu_custom_call.1} parent=1 // pred_check
      _
    $region3: #{tpu_custom_call.1} parent=1 // pred_check_branch
      %18 = sbr.rel (0) target = $region5
    $region4: #{tpu_custom_call.1} parent=1 // pred_region
      %s20 = ssub.s32 256, 256
      %21 = vsyncadd [#allocation3], %s20
      %s22 = sshll.u32 [#allocation2], 4
      %s23 = int_to_ptr.vmem [resolvable:$true] %s22
      %28 = dma.hbm_to_vmem [thread:$0]  %s0, 256, %s23, [#allocation3], 128, 128, 8
    $region5: #{tpu_custom_call.1} parent=1 // pred_fallthru
      _
    // Predicated region
    $region6: #{tpu_custom_call.1} parent=1 // pred_check
      _
    $region7: #{tpu_custom_call.1} parent=1 // pred_check_branch
      %30 = sbr.rel (0) target = $region9
    $region8: #{tpu_custom_call.1} parent=1 // pred_region
      %s32 = ssub.s32 256, 256
      %33 = vsyncadd [#allocation6], %s32
      %s34 = sshll.u32 [#allocation5], 4
      %s35 = int_to_ptr.vmem [resolvable:$true] %s34
      %40 = dma.hbm_to_vmem [thread:$0]  %s1, 256, %s35, [#allocation6], 128, 128, 8
    $region9: #{tpu_custom_call.1} parent=1 // pred_fallthru
      _
    // Predicated region
    $region10: #{tpu_custom_call.1} parent=1 // pred_check
      _
    $region11: #{tpu_custom_call.1} parent=1 // pred_check_branch
      %42 = sbr.rel (0) target = $region13
    $region12: #{tpu_custom_call.1} parent=1 // pred_region
      %s44 = ssub.s32 512, 512
      %45 = vsyncadd [#allocation6], %s44
      %s46 = sshll.u32 [#allocation7], 4
      %s47 = int_to_ptr.vmem [resolvable:$true] %s46
      %52 = dma.hbm_to_vmem [thread:$0]  %s2, 512, %s47, [#allocation6], 128, 128, 8
    $region13: #{tpu_custom_call.1} parent=1 // pred_fallthru
      _
    // Predicated region
    $region14: #{tpu_custom_call.1} parent=1 // pred_check
      _
    $region15: #{tpu_custom_call.1} parent=1 // pred_check_branch
      %54 = sbr.rel (0) target = $region17
    $region16: #{tpu_custom_call.1} parent=1 // pred_region
      %s56 = ssub.s32 512, 512
      %57 = vsyncadd [#allocation9], %s56
      %s58 = sshll.u32 [#allocation8], 4
      %s59 = int_to_ptr.vmem [resolvable:$true] %s58
      %64 = dma.hbm_to_vmem [thread:$0]  %s3, 512, %s59, [#allocation9], 128, 128, 8
    $region17: #{tpu_custom_call.1} parent=1 // pred_fallthru
      _
    // Predicated region
    $region18: #{tpu_custom_call.1} parent=1 // pred_check
      _
    $region19: #{tpu_custom_call.1} parent=1 // pred_check_branch
      %66 = sbr.rel (0) target = $region21
    $region20: #{tpu_custom_call.1} parent=1 // pred_region
      %s68 = ssub.s32 512, 512
      %69 = vsyncadd [#allocation9], %s68
      %s70 = sshll.u32 [#allocation10], 4
      %s71 = int_to_ptr.vmem [resolvable:$true] %s70
      %76 = dma.hbm_to_vmem [thread:$0]  %s4, 512, %s71, [#allocation9], 128, 128, 8
    $region21: #{tpu_custom_call.1} parent=1 // pred_fallthru
      _
    // Predicated region
    $region22: #{tpu_custom_call.1} parent=1 // pred_check
      _
    $region23: #{tpu_custom_call.1} parent=1 // pred_check_branch
      %78 = sbr.rel (0) target = $region25
    $region24: #{tpu_custom_call.1} parent=1 // pred_region
      %s80 = ssub.s32 512, 512
      %81 = vsyncadd [#allocation12], %s80
      %s82 = sshll.u32 [#allocation11], 4
      %s83 = int_to_ptr.vmem [resolvable:$true] %s82
      %88 = dma.hbm_to_vmem [thread:$0]  %s5, 512, %s83, [#allocation12], 128, 128, 8
    $region25: #{tpu_custom_call.1} parent=1 // pred_fallthru
      _
    // Predicated region
    $region26: #{tpu_custom_call.1} parent=1 // pred_check
      _
    $region27: #{tpu_custom_call.1} parent=1 // pred_check_branch
      %90 = sbr.rel (0) target = $region29
    $region28: #{tpu_custom_call.1} parent=1 // pred_region
      _
    $region29: #{tpu_custom_call.1} parent=1 // pred_fallthru
      _
    // Predicated region
    $region30: #{tpu_custom_call.1} parent=1 // pred_check
      _
    $region31: #{tpu_custom_call.1} parent=1 // pred_check_branch
      %92 = sbr.rel (0) target = $region33
    $region32: #{tpu_custom_call.1} parent=1 // pred_region
      %93 = dma.done [#allocation3], 256
    $region33: #{tpu_custom_call.1} parent=1 // pred_fallthru
      _
    // Predicated region
    $region34: #{tpu_custom_call.1} parent=1 // pred_check
      _
    $region35: #{tpu_custom_call.1} parent=1 // pred_check_branch
      %95 = sbr.rel (0) target = $region37
    $region36: #{tpu_custom_call.1} parent=1 // pred_region
      %96 = dma.done [#allocation6], 256
    $region37: #{tpu_custom_call.1} parent=1 // pred_fallthru
      _
    // Predicated region
    $region38: #{tpu_custom_call.1} parent=1 // pred_check
      _
    $region39: #{tpu_custom_call.1} parent=1 // pred_check_branch
      %98 = sbr.rel (0) target = $region41
    $region40: #{tpu_custom_call.1} parent=1 // pred_region
      %99 = dma.done [#allocation6], 512
    $region41: #{tpu_custom_call.1} parent=1 // pred_fallthru
      _
    // Predicated region
    $region42: #{tpu_custom_call.1} parent=1 // pred_check
      _
    $region43: #{tpu_custom_call.1} parent=1 // pred_check_branch
      %101 = sbr.rel (0) target = $region45
    $region44: #{tpu_custom_call.1} parent=1 // pred_region
      %102 = dma.done [#allocation9], 512
    $region45: #{tpu_custom_call.1} parent=1 // pred_fallthru
      _
    // Predicated region
    $region46: #{tpu_custom_call.1} parent=1 // pred_check
      _
    $region47: #{tpu_custom_call.1} parent=1 // pred_check_branch
      %104 = sbr.rel (0) target = $region49
    $region48: #{tpu_custom_call.1} parent=1 // pred_region
      %105 = dma.done [#allocation9], 512
    $region49: #{tpu_custom_call.1} parent=1 // pred_fallthru
      _
    // Predicated region
    $region50: #{tpu_custom_call.1} parent=1 // pred_check
      _
    $region51: #{tpu_custom_call.1} parent=1 // pred_check_branch
      %107 = sbr.rel (0) target = $region53
    $region52: #{tpu_custom_call.1} parent=1 // pred_region
      %108 = dma.done [#allocation12], 512
    $region53: #{tpu_custom_call.1} parent=1 // pred_fallthru
      _
    %v109 = vld [vmem:[#allocation2] sm:$0xff]
    %v110 = vld [vmem:[#allocation2 + $0x8] sm:$0xff]
    %v111 = vld [vmem:[#allocation5] sm:$0xff]
    %v112 = vld [vmem:[#allocation5 + $0x8] sm:$0xff]
    %v113 = vld [vmem:[#allocation7] sm:$0xff]
    %v114 = vld [vmem:[#allocation7 + $0x8] sm:$0xff]
    %v115 = vld [vmem:[#allocation7 + $0x10] sm:$0xff]
    %v116 = vld [vmem:[#allocation7 + $0x18] sm:$0xff]
    %vm117 = vcmask 261120
    %v119 = vsel %vm117, %v111, 0
    %v122 = vsel %vm117, %v112, 0
    %124 = vmatprep.subr.mxu0 0.0
    %125 = vmatpush1.msra.mxu0 0.0
    %126 = vmatprep.subr.mxu0 0.0
    %127 = vmatpush1.msra.mxu0 0.0
    %128 = vmatprep.subr.mxu0 0.0
    %129 = vmatpush1.msra.mxu0 0.0
    %130 = vmatprep.subr.mxu0 0.0
    %131 = vmatpush1.msra.mxu0 0.0
    %132 = vmatprep.subr.mxu0 0.0
    %133 = vmatpush1.msra.mxu0 0.0
    %134 = vmatprep.subr.mxu0 0.0
    %135 = vmatpush1.msra.mxu0 0.0
    %136 = vmatprep.subr.mxu0 0.0
    %137 = vmatpush1.msra.mxu0 0.0
    %138 = vmatprep.subr.mxu0 0.0
    %139 = vmatpush1.msra.mxu0 0.0
    %140 = vmatprep.subr.mxu0 0.0
    %141 = vmatpush1.msra.mxu0 0.0
    %142 = vmatprep.subr.mxu0 0.0
    %143 = vmatpush1.msra.mxu0 0.0
    %144 = vmatprep.subr.mxu0 0.0
    %145 = vmatpush1.msra.mxu0 0.0
    %146 = vmatprep.subr.mxu0 0.0
    %147 = vmatpush1.msra.mxu0 0.0
    %148 = vmatprep.subr.mxu0 0.0
    %149 = vmatpush1.msra.mxu0 %v116
    %150 = vmatprep.subr.mxu0 0.0
    %151 = vmatpush1.msra.mxu0 %v115
    %152 = vmatprep.subr.mxu0 0.0
    %153 = vmatpush1.msra.mxu0 %v114
    %154 = vmatprep.subr.mxu0 0.0
    %155 = vmatpush1.msra.mxu0 %v113
    %156 = vmatprep.subr.mxu0 0.0
    %157 = vmatpush2.msra.mxu0 0.0
    %158 = vmatprep.subr.mxu0 0.0
    %159 = vmatpush2.msra.mxu0 0.0
    %160 = vmatprep.subr.mxu0 0.0
    %161 = vmatpush2.msra.mxu0 0.0
    %162 = vmatprep.subr.mxu0 0.0
    %163 = vmatpush2.msra.mxu0 0.0
    %164 = vmatprep.subr.mxu0 0.0
    %165 = vmatpush2.msra.mxu0 0.0
    %166 = vmatprep.subr.mxu0 0.0
    %167 = vmatpush2.msra.mxu0 0.0
    %168 = vmatprep.subr.mxu0 0.0
    %169 = vmatpush2.msra.mxu0 0.0
    %170 = vmatprep.subr.mxu0 0.0
    %171 = vmatpush2.msra.mxu0 0.0
    %172 = vmatprep.subr.mxu0 0.0
    %173 = vmatpush2.msra.mxu0 0.0
    %174 = vmatprep.subr.mxu0 0.0
    %175 = vmatpush2.msra.mxu0 0.0
    %176 = vmatprep.subr.mxu0 0.0
    %177 = vmatpush2.msra.mxu0 0.0
    %178 = vmatprep.subr.mxu0 0.0
    %179 = vmatpush2.msra.mxu0 0.0
    %180 = vmatprep.subr.mxu0 0.0
    %181 = vmatpush2.msra.mxu0 0.0
    %182 = vmatprep.subr.mxu0 0.0
    %183 = vmatpush2.msra.mxu0 0.0
    %184 = vmatprep.subr.mxu0 0.0
    %185 = vmatpush2.msra.mxu0 0.0
    %186 = vmatprep.subr.mxu0 0.0
    %187 = vmatpush2.msra.mxu0 0.0
    %188 = vmatprep.mubr.f32.mxu0 0.0
    %189 = vmatmul.mubr.f32.gmra.mxu0 %v119
    %v190 = vpop.f32.mrf.mxu0
    %v191 = vadd.f32 0.0, %v190
    %v192 = vpop.f32.mrf.mxu0
    %193 = vmatprep.mubr.f32.mxu0 0.0
    %194 = vmatmul.mubr.f32.gmra.mxu0 %v122
    %v195 = vpop.f32.mrf.mxu0
    %v196 = vadd.f32 0.0, %v195
    %v197 = vpop.f32.mrf.mxu0
    %198 = vdwg.mxu0
    %v199 = vld [vmem:[#allocation8] sm:$0xff]
    %v200 = vld [vmem:[#allocation8 + $0x8] sm:$0xff]
    %v201 = vld [vmem:[#allocation8 + $0x10] sm:$0xff]
    %v202 = vld [vmem:[#allocation8 + $0x18] sm:$0xff]
    %v204 = vsel %vm117, %v109, 0
    %v207 = vsel %vm117, %v110, 0
    %209 = vmatprep.subr.mxu0 0.0
    %210 = vmatpush1.msra.mxu0 0.0
    %211 = vmatprep.subr.mxu0 0.0
    %212 = vmatpush1.msra.mxu0 0.0
    %213 = vmatprep.subr.mxu0 0.0
    %214 = vmatpush1.msra.mxu0 0.0
    %215 = vmatprep.subr.mxu0 0.0
    %216 = vmatpush1.msra.mxu0 0.0
    %217 = vmatprep.subr.mxu0 0.0
    %218 = vmatpush1.msra.mxu0 0.0
    %219 = vmatprep.subr.mxu0 0.0
    %220 = vmatpush1.msra.mxu0 0.0
    %221 = vmatprep.subr.mxu0 0.0
    %222 = vmatpush1.msra.mxu0 0.0
    %223 = vmatprep.subr.mxu0 0.0
    %224 = vmatpush1.msra.mxu0 0.0
    %225 = vmatprep.subr.mxu0 0.0
    %226 = vmatpush1.msra.mxu0 0.0
    %227 = vmatprep.subr.mxu0 0.0
    %228 = vmatpush1.msra.mxu0 0.0
    %229 = vmatprep.subr.mxu0 0.0
    %230 = vmatpush1.msra.mxu0 0.0
    %231 = vmatprep.subr.mxu0 0.0
    %232 = vmatpush1.msra.mxu0 0.0
    %233 = vmatprep.subr.mxu0 0.0
    %234 = vmatpush1.msra.mxu0 %v202
    %235 = vmatprep.subr.mxu0 0.0
    %236 = vmatpush1.msra.mxu0 %v201
    %237 = vmatprep.subr.mxu0 0.0
    %238 = vmatpush1.msra.mxu0 %v200
    %239 = vmatprep.subr.mxu0 0.0
    %240 = vmatpush1.msra.mxu0 %v199
    %241 = vmatprep.subr.mxu0 0.0
    %242 = vmatpush2.msra.mxu0 0.0
    %243 = vmatprep.subr.mxu0 0.0
    %244 = vmatpush2.msra.mxu0 0.0
    %245 = vmatprep.subr.mxu0 0.0
    %246 = vmatpush2.msra.mxu0 0.0
    %247 = vmatprep.subr.mxu0 0.0
    %248 = vmatpush2.msra.mxu0 0.0
    %249 = vmatprep.subr.mxu0 0.0
    %250 = vmatpush2.msra.mxu0 0.0
    %251 = vmatprep.subr.mxu0 0.0
    %252 = vmatpush2.msra.mxu0 0.0
    %253 = vmatprep.subr.mxu0 0.0
    %254 = vmatpush2.msra.mxu0 0.0
    %255 = vmatprep.subr.mxu0 0.0
    %256 = vmatpush2.msra.mxu0 0.0
    %257 = vmatprep.subr.mxu0 0.0
    %258 = vmatpush2.msra.mxu0 0.0
    %259 = vmatprep.subr.mxu0 0.0
    %260 = vmatpush2.msra.mxu0 0.0
    %261 = vmatprep.subr.mxu0 0.0
    %262 = vmatpush2.msra.mxu0 0.0
    %263 = vmatprep.subr.mxu0 0.0
    %264 = vmatpush2.msra.mxu0 0.0
    %265 = vmatprep.subr.mxu0 0.0
    %266 = vmatpush2.msra.mxu0 0.0
    %267 = vmatprep.subr.mxu0 0.0
    %268 = vmatpush2.msra.mxu0 0.0
    %269 = vmatprep.subr.mxu0 0.0
    %270 = vmatpush2.msra.mxu0 0.0
    %271 = vmatprep.subr.mxu0 0.0
    %272 = vmatpush2.msra.mxu0 0.0
    %273 = vmatprep.mubr.f32.mxu0 0.0
    %274 = vmatmul.mubr.f32.gmra.mxu0 %v204
    %v275 = vpop.f32.mrf.mxu0
    %v276 = vadd.f32 0.0, %v275
    %v277 = vpop.f32.mrf.mxu0
    %278 = vmatprep.mubr.f32.mxu0 0.0
    %279 = vmatmul.mubr.f32.gmra.mxu0 %v207
    %v280 = vpop.f32.mrf.mxu0
    %v281 = vadd.f32 0.0, %v280
    %v282 = vpop.f32.mrf.mxu0
    %283 = vdwg.mxu0
    %v284 = vld [vmem:[#allocation10] sm:$0xff]
    %v285 = vld [vmem:[#allocation10 + $0x8] sm:$0xff]
    %v286 = vld [vmem:[#allocation10 + $0x10] sm:$0xff]
    %v287 = vld [vmem:[#allocation10 + $0x18] sm:$0xff]
    %288 = vmatprep.subr.mxu0 0.0
    %289 = vmatpush1.msra.mxu0 0.0
    %290 = vmatprep.subr.mxu0 0.0
    %291 = vmatpush1.msra.mxu0 0.0
    %292 = vmatprep.subr.mxu0 0.0
    %293 = vmatpush1.msra.mxu0 0.0
    %294 = vmatprep.subr.mxu0 0.0
    %295 = vmatpush1.msra.mxu0 0.0
    %296 = vmatprep.subr.mxu0 0.0
    %297 = vmatpush1.msra.mxu0 0.0
    %298 = vmatprep.subr.mxu0 0.0
    %299 = vmatpush1.msra.mxu0 0.0
    %300 = vmatprep.subr.mxu0 0.0
    %301 = vmatpush1.msra.mxu0 0.0
    %302 = vmatprep.subr.mxu0 0.0
    %303 = vmatpush1.msra.mxu0 0.0
    %304 = vmatprep.subr.mxu0 0.0
    %305 = vmatpush1.msra.mxu0 0.0
    %306 = vmatprep.subr.mxu0 0.0
    %307 = vmatpush1.msra.mxu0 0.0
    %308 = vmatprep.subr.mxu0 0.0
    %309 = vmatpush1.msra.mxu0 0.0
    %310 = vmatprep.subr.mxu0 0.0
    %311 = vmatpush1.msra.mxu0 0.0
    %312 = vmatprep.subr.mxu0 0.0
    %313 = vmatpush1.msra.mxu0 %v287
    %314 = vmatprep.subr.mxu0 0.0
    %315 = vmatpush1.msra.mxu0 %v286
    %316 = vmatprep.subr.mxu0 0.0
    %317 = vmatpush1.msra.mxu0 %v285
    %318 = vmatprep.subr.mxu0 0.0
    %319 = vmatpush1.msra.mxu0 %v284
    %320 = vmatprep.subr.mxu0 0.0
    %321 = vmatpush2.msra.mxu0 0.0
    %322 = vmatprep.subr.mxu0 0.0
    %323 = vmatpush2.msra.mxu0 0.0
    %324 = vmatprep.subr.mxu0 0.0
    %325 = vmatpush2.msra.mxu0 0.0
    %326 = vmatprep.subr.mxu0 0.0
    %327 = vmatpush2.msra.mxu0 0.0
    %328 = vmatprep.subr.mxu0 0.0
    %329 = vmatpush2.msra.mxu0 0.0
    %330 = vmatprep.subr.mxu0 0.0
    %331 = vmatpush2.msra.mxu0 0.0
    %332 = vmatprep.subr.mxu0 0.0
    %333 = vmatpush2.msra.mxu0 0.0
    %334 = vmatprep.subr.mxu0 0.0
    %335 = vmatpush2.msra.mxu0 0.0
    %336 = vmatprep.subr.mxu0 0.0
    %337 = vmatpush2.msra.mxu0 0.0
    %338 = vmatprep.subr.mxu0 0.0
    %339 = vmatpush2.msra.mxu0 0.0
    %340 = vmatprep.subr.mxu0 0.0
    %341 = vmatpush2.msra.mxu0 0.0
    %342 = vmatprep.subr.mxu0 0.0
    %343 = vmatpush2.msra.mxu0 0.0
    %344 = vmatprep.subr.mxu0 0.0
    %345 = vmatpush2.msra.mxu0 0.0
    %346 = vmatprep.subr.mxu0 0.0
    %347 = vmatpush2.msra.mxu0 0.0
    %348 = vmatprep.subr.mxu0 0.0
    %349 = vmatpush2.msra.mxu0 0.0
    %350 = vmatprep.subr.mxu0 0.0
    %351 = vmatpush2.msra.mxu0 0.0
    %352 = vmatprep.mubr.f32.mxu0 0.0
    %353 = vmatmul.mubr.f32.gmra.mxu0 %v204
    %v354 = vpop.f32.mrf.mxu0
    %v355 = vadd.f32 0.0, %v354
    %v356 = vpop.f32.mrf.mxu0
    %357 = vmatprep.mubr.f32.mxu0 0.0
    %358 = vmatmul.mubr.f32.gmra.mxu0 %v207
    %v359 = vpop.f32.mrf.mxu0
    %v360 = vadd.f32 0.0, %v359
    %v361 = vpop.f32.mrf.mxu0
    %362 = vdwg.mxu0
    %vm363 = vcmask 64512
    %v365 = vsel %vm363, %v191, 0
    %v368 = vsel %vm363, %v276, 0
    %370 = vmatprep.subr.mxu0 0.0
    %371 = vmatpush1.xpose.msra.mxu0 0.0
    %372 = vmatprep.subr.mxu0 0.0
    %373 = vmatpush1.xpose.msra.mxu0 0.0
    %374 = vmatprep.subr.mxu0 0.0
    %375 = vmatpush1.xpose.msra.mxu0 0.0
    %376 = vmatprep.subr.mxu0 0.0
    %377 = vmatpush1.xpose.msra.mxu0 0.0
    %378 = vmatprep.subr.mxu0 0.0
    %379 = vmatpush1.xpose.msra.mxu0 0.0
    %380 = vmatprep.subr.mxu0 0.0
    %381 = vmatpush1.xpose.msra.mxu0 0.0
    %382 = vmatprep.subr.mxu0 0.0
    %383 = vmatpush1.xpose.msra.mxu0 0.0
    %384 = vmatprep.subr.mxu0 0.0
    %385 = vmatpush1.xpose.msra.mxu0 0.0
    %386 = vmatprep.subr.mxu0 0.0
    %387 = vmatpush1.xpose.msra.mxu0 0.0
    %388 = vmatprep.subr.mxu0 0.0
    %389 = vmatpush1.xpose.msra.mxu0 0.0
    %390 = vmatprep.subr.mxu0 0.0
    %391 = vmatpush1.xpose.msra.mxu0 0.0
    %392 = vmatprep.subr.mxu0 0.0
    %393 = vmatpush1.xpose.msra.mxu0 0.0
    %394 = vmatprep.subr.mxu0 0.0
    %395 = vmatpush1.xpose.msra.mxu0 0.0
    %396 = vmatprep.subr.mxu0 0.0
    %397 = vmatpush1.xpose.msra.mxu0 0.0
    %398 = vmatprep.subr.mxu0 0.0
    %399 = vmatpush1.xpose.msra.mxu0 0.0
    %400 = vmatprep.subr.mxu0 0.0
    %401 = vmatpush1.xpose.msra.mxu0 %v368
    %402 = vmatprep.subr.mxu0 0.0
    %403 = vmatpush2.xpose.msra.mxu0 0.0
    %404 = vmatprep.subr.mxu0 0.0
    %405 = vmatpush2.xpose.msra.mxu0 0.0
    %406 = vmatprep.subr.mxu0 0.0
    %407 = vmatpush2.xpose.msra.mxu0 0.0
    %408 = vmatprep.subr.mxu0 0.0
    %409 = vmatpush2.xpose.msra.mxu0 0.0
    %410 = vmatprep.subr.mxu0 0.0
    %411 = vmatpush2.xpose.msra.mxu0 0.0
    %412 = vmatprep.subr.mxu0 0.0
    %413 = vmatpush2.xpose.msra.mxu0 0.0
    %414 = vmatprep.subr.mxu0 0.0
    %415 = vmatpush2.xpose.msra.mxu0 0.0
    %416 = vmatprep.subr.mxu0 0.0
    %417 = vmatpush2.xpose.msra.mxu0 0.0
    %418 = vmatprep.subr.mxu0 0.0
    %419 = vmatpush2.xpose.msra.mxu0 0.0
    %420 = vmatprep.subr.mxu0 0.0
    %421 = vmatpush2.xpose.msra.mxu0 0.0
    %422 = vmatprep.subr.mxu0 0.0
    %423 = vmatpush2.xpose.msra.mxu0 0.0
    %424 = vmatprep.subr.mxu0 0.0
    %425 = vmatpush2.xpose.msra.mxu0 0.0
    %426 = vmatprep.subr.mxu0 0.0
    %427 = vmatpush2.xpose.msra.mxu0 0.0
    %428 = vmatprep.subr.mxu0 0.0
    %429 = vmatpush2.xpose.msra.mxu0 0.0
    %430 = vmatprep.subr.mxu0 0.0
    %431 = vmatpush2.xpose.msra.mxu0 0.0
    %432 = vmatprep.subr.mxu0 0.0
    %433 = vmatpush2.xpose.msra.mxu0 0.0
    %434 = vmatprep.mubr.f32.mxu0 0.0
    %435 = vmatmul.mubr.f32.gmra.mxu0 %v365
    %v436 = vpop.f32.mrf.mxu0
    %v437 = vadd.f32 0.0, %v436
    %v438 = vpop.f32.mrf.mxu0
    %439 = vdwg.mxu0
    %v441 = vsel %vm363, %v196, 0
    %v444 = vsel %vm363, %v281, 0
    %446 = vmatprep.subr.mxu0 0.0
    %447 = vmatpush1.xpose.msra.mxu0 0.0
    %448 = vmatprep.subr.mxu0 0.0
    %449 = vmatpush1.xpose.msra.mxu0 0.0
    %450 = vmatprep.subr.mxu0 0.0
    %451 = vmatpush1.xpose.msra.mxu0 0.0
    %452 = vmatprep.subr.mxu0 0.0
    %453 = vmatpush1.xpose.msra.mxu0 0.0
    %454 = vmatprep.subr.mxu0 0.0
    %455 = vmatpush1.xpose.msra.mxu0 0.0
    %456 = vmatprep.subr.mxu0 0.0
    %457 = vmatpush1.xpose.msra.mxu0 0.0
    %458 = vmatprep.subr.mxu0 0.0
    %459 = vmatpush1.xpose.msra.mxu0 0.0
    %460 = vmatprep.subr.mxu0 0.0
    %461 = vmatpush1.xpose.msra.mxu0 0.0
    %462 = vmatprep.subr.mxu0 0.0
    %463 = vmatpush1.xpose.msra.mxu0 0.0
    %464 = vmatprep.subr.mxu0 0.0
    %465 = vmatpush1.xpose.msra.mxu0 0.0
    %466 = vmatprep.subr.mxu0 0.0
    %467 = vmatpush1.xpose.msra.mxu0 0.0
    %468 = vmatprep.subr.mxu0 0.0
    %469 = vmatpush1.xpose.msra.mxu0 0.0
    %470 = vmatprep.subr.mxu0 0.0
    %471 = vmatpush1.xpose.msra.mxu0 0.0
    %472 = vmatprep.subr.mxu0 0.0
    %473 = vmatpush1.xpose.msra.mxu0 0.0
    %474 = vmatprep.subr.mxu0 0.0
    %475 = vmatpush1.xpose.msra.mxu0 0.0
    %476 = vmatprep.subr.mxu0 0.0
    %477 = vmatpush1.xpose.msra.mxu0 %v444
    %478 = vmatprep.subr.mxu0 0.0
    %479 = vmatpush2.xpose.msra.mxu0 0.0
    %480 = vmatprep.subr.mxu0 0.0
    %481 = vmatpush2.xpose.msra.mxu0 0.0
    %482 = vmatprep.subr.mxu0 0.0
    %483 = vmatpush2.xpose.msra.mxu0 0.0
    %484 = vmatprep.subr.mxu0 0.0
    %485 = vmatpush2.xpose.msra.mxu0 0.0
    %486 = vmatprep.subr.mxu0 0.0
    %487 = vmatpush2.xpose.msra.mxu0 0.0
    %488 = vmatprep.subr.mxu0 0.0
    %489 = vmatpush2.xpose.msra.mxu0 0.0
    %490 = vmatprep.subr.mxu0 0.0
    %491 = vmatpush2.xpose.msra.mxu0 0.0
    %492 = vmatprep.subr.mxu0 0.0
    %493 = vmatpush2.xpose.msra.mxu0 0.0
    %494 = vmatprep.subr.mxu0 0.0
    %495 = vmatpush2.xpose.msra.mxu0 0.0
    %496 = vmatprep.subr.mxu0 0.0
    %497 = vmatpush2.xpose.msra.mxu0 0.0
    %498 = vmatprep.subr.mxu0 0.0
    %499 = vmatpush2.xpose.msra.mxu0 0.0
    %500 = vmatprep.subr.mxu0 0.0
    %501 = vmatpush2.xpose.msra.mxu0 0.0
    %502 = vmatprep.subr.mxu0 0.0
    %503 = vmatpush2.xpose.msra.mxu0 0.0
    %504 = vmatprep.subr.mxu0 0.0
    %505 = vmatpush2.xpose.msra.mxu0 0.0
    %506 = vmatprep.subr.mxu0 0.0
    %507 = vmatpush2.xpose.msra.mxu0 0.0
    %508 = vmatprep.subr.mxu0 0.0
    %509 = vmatpush2.xpose.msra.mxu0 0.0
    %510 = vmatprep.mubr.f32.mxu0 0.0
    %511 = vmatmul.mubr.f32.gmra.mxu0 %v441
    %v512 = vpop.f32.mrf.mxu0
    %v513 = vadd.f32 0.0, %v512
    %v514 = vpop.f32.mrf.mxu0
    %515 = vdwg.mxu0
    %v516 = vsel %vm363, %v437, -inf
    %517 = vmax.xlane.f32.xlu0 %v516
    %v518 = vpop.xlane.xlu0 %517
    %v519 = vsel %vm363, %v513, -inf
    %520 = vmax.xlane.f32.xlu0 %v519
    %v521 = vpop.xlane.xlu0 %520
    %v522 = vsub.f32 %v437, %v518
    %v523 = vsub.f32 %v513, %v521
    %v524 = vmul.f32 %v522, 1.442695
    %v525 = vpow.pop %v524
    %v526 = vmul.f32 %v523, 1.442695
    %v527 = vpow.pop %v526
    %v528 = vsel %vm363, %v525, 0.0
    %529 = vadd.xlane.f32.xlu0 %v528
    %v530 = vpop.xlane.xlu0 %529
    %v531 = vsel %vm363, %v527, 0.0
    %532 = vadd.xlane.f32.xlu0 %v531
    %v533 = vpop.xlane.xlu0 %532
    %v534 = vrcp.pop %v530
    %v535 = vrcp.pop %v533
    %v536 = vmul.f32 %v525, %v534
    %v537 = vmul.f32 %v527, %v535
    %v539 = vsel %vm363, %v536, 0
    %541 = vmatprep.subr.mxu0 0.0
    %542 = vmatpush1.msra.mxu0 0.0
    %543 = vmatprep.subr.mxu0 0.0
    %544 = vmatpush1.msra.mxu0 0.0
    %545 = vmatprep.subr.mxu0 0.0
    %546 = vmatpush1.msra.mxu0 0.0
    %547 = vmatprep.subr.mxu0 0.0
    %548 = vmatpush1.msra.mxu0 0.0
    %549 = vmatprep.subr.mxu0 0.0
    %550 = vmatpush1.msra.mxu0 0.0
    %551 = vmatprep.subr.mxu0 0.0
    %552 = vmatpush1.msra.mxu0 0.0
    %553 = vmatprep.subr.mxu0 0.0
    %554 = vmatpush1.msra.mxu0 0.0
    %555 = vmatprep.subr.mxu0 0.0
    %556 = vmatpush1.msra.mxu0 0.0
    %557 = vmatprep.subr.mxu0 0.0
    %558 = vmatpush1.msra.mxu0 0.0
    %559 = vmatprep.subr.mxu0 0.0
    %560 = vmatpush1.msra.mxu0 0.0
    %561 = vmatprep.subr.mxu0 0.0
    %562 = vmatpush1.msra.mxu0 0.0
    %563 = vmatprep.subr.mxu0 0.0
    %564 = vmatpush1.msra.mxu0 0.0
    %565 = vmatprep.subr.mxu0 0.0
    %566 = vmatpush1.msra.mxu0 0.0
    %567 = vmatprep.subr.mxu0 0.0
    %568 = vmatpush1.msra.mxu0 0.0
    %569 = vmatprep.subr.mxu0 0.0
    %570 = vmatpush1.msra.mxu0 0.0
    %571 = vmatprep.subr.mxu0 0.0
    %572 = vmatpush1.msra.mxu0 %v355
    %573 = vmatprep.subr.mxu0 0.0
    %574 = vmatpush2.msra.mxu0 0.0
    %575 = vmatprep.subr.mxu0 0.0
    %576 = vmatpush2.msra.mxu0 0.0
    %577 = vmatprep.subr.mxu0 0.0
    %578 = vmatpush2.msra.mxu0 0.0
    %579 = vmatprep.subr.mxu0 0.0
    %580 = vmatpush2.msra.mxu0 0.0
    %581 = vmatprep.subr.mxu0 0.0
    %582 = vmatpush2.msra.mxu0 0.0
    %583 = vmatprep.subr.mxu0 0.0
    %584 = vmatpush2.msra.mxu0 0.0
    %585 = vmatprep.subr.mxu0 0.0
    %586 = vmatpush2.msra.mxu0 0.0
    %587 = vmatprep.subr.mxu0 0.0
    %588 = vmatpush2.msra.mxu0 0.0
    %589 = vmatprep.subr.mxu0 0.0
    %590 = vmatpush2.msra.mxu0 0.0
    %591 = vmatprep.subr.mxu0 0.0
    %592 = vmatpush2.msra.mxu0 0.0
    %593 = vmatprep.subr.mxu0 0.0
    %594 = vmatpush2.msra.mxu0 0.0
    %595 = vmatprep.subr.mxu0 0.0
    %596 = vmatpush2.msra.mxu0 0.0
    %597 = vmatprep.subr.mxu0 0.0
    %598 = vmatpush2.msra.mxu0 0.0
    %599 = vmatprep.subr.mxu0 0.0
    %600 = vmatpush2.msra.mxu0 0.0
    %601 = vmatprep.subr.mxu0 0.0
    %602 = vmatpush2.msra.mxu0 0.0
    %603 = vmatprep.subr.mxu0 0.0
    %604 = vmatpush2.msra.mxu0 0.0
    %605 = vmatprep.mubr.f32.mxu0 0.0
    %606 = vmatmul.mubr.f32.gmra.mxu0 %v539
    %v607 = vpop.f32.mrf.mxu0
    %v608 = vadd.f32 0.0, %v607
    %v609 = vpop.f32.mrf.mxu0
    %610 = vdwg.mxu0
    %v612 = vsel %vm363, %v537, 0
    %614 = vmatprep.subr.mxu0 0.0
    %615 = vmatpush1.msra.mxu0 0.0
    %616 = vmatprep.subr.mxu0 0.0
    %617 = vmatpush1.msra.mxu0 0.0
    %618 = vmatprep.subr.mxu0 0.0
    %619 = vmatpush1.msra.mxu0 0.0
    %620 = vmatprep.subr.mxu0 0.0
    %621 = vmatpush1.msra.mxu0 0.0
    %622 = vmatprep.subr.mxu0 0.0
    %623 = vmatpush1.msra.mxu0 0.0
    %624 = vmatprep.subr.mxu0 0.0
    %625 = vmatpush1.msra.mxu0 0.0
    %626 = vmatprep.subr.mxu0 0.0
    %627 = vmatpush1.msra.mxu0 0.0
    %628 = vmatprep.subr.mxu0 0.0
    %629 = vmatpush1.msra.mxu0 0.0
    %630 = vmatprep.subr.mxu0 0.0
    %631 = vmatpush1.msra.mxu0 0.0
    %632 = vmatprep.subr.mxu0 0.0
    %633 = vmatpush1.msra.mxu0 0.0
    %634 = vmatprep.subr.mxu0 0.0
    %635 = vmatpush1.msra.mxu0 0.0
    %636 = vmatprep.subr.mxu0 0.0
    %637 = vmatpush1.msra.mxu0 0.0
    %638 = vmatprep.subr.mxu0 0.0
    %639 = vmatpush1.msra.mxu0 0.0
    %640 = vmatprep.subr.mxu0 0.0
    %641 = vmatpush1.msra.mxu0 0.0
    %642 = vmatprep.subr.mxu0 0.0
    %643 = vmatpush1.msra.mxu0 0.0
    %644 = vmatprep.subr.mxu0 0.0
    %645 = vmatpush1.msra.mxu0 %v360
    %646 = vmatprep.subr.mxu0 0.0
    %647 = vmatpush2.msra.mxu0 0.0
    %648 = vmatprep.subr.mxu0 0.0
    %649 = vmatpush2.msra.mxu0 0.0
    %650 = vmatprep.subr.mxu0 0.0
    %651 = vmatpush2.msra.mxu0 0.0
    %652 = vmatprep.subr.mxu0 0.0
    %653 = vmatpush2.msra.mxu0 0.0
    %654 = vmatprep.subr.mxu0 0.0
    %655 = vmatpush2.msra.mxu0 0.0
    %656 = vmatprep.subr.mxu0 0.0
    %657 = vmatpush2.msra.mxu0 0.0
    %658 = vmatprep.subr.mxu0 0.0
    %659 = vmatpush2.msra.mxu0 0.0
    %660 = vmatprep.subr.mxu0 0.0
    %661 = vmatpush2.msra.mxu0 0.0
    %662 = vmatprep.subr.mxu0 0.0
    %663 = vmatpush2.msra.mxu0 0.0
    %664 = vmatprep.subr.mxu0 0.0
    %665 = vmatpush2.msra.mxu0 0.0
    %666 = vmatprep.subr.mxu0 0.0
    %667 = vmatpush2.msra.mxu0 0.0
    %668 = vmatprep.subr.mxu0 0.0
    %669 = vmatpush2.msra.mxu0 0.0
    %670 = vmatprep.subr.mxu0 0.0
    %671 = vmatpush2.msra.mxu0 0.0
    %672 = vmatprep.subr.mxu0 0.0
    %673 = vmatpush2.msra.mxu0 0.0
    %674 = vmatprep.subr.mxu0 0.0
    %675 = vmatpush2.msra.mxu0 0.0
    %676 = vmatprep.subr.mxu0 0.0
    %677 = vmatpush2.msra.mxu0 0.0
    %678 = vmatprep.mubr.f32.mxu0 0.0
    %679 = vmatmul.mubr.f32.gmra.mxu0 %v612
    %v680 = vpop.f32.mrf.mxu0
    %v681 = vadd.f32 0.0, %v680
    %v682 = vpop.f32.mrf.mxu0
    %683 = vdwg.mxu0
    %684 = vrot.lane.b32.xlu0 %v191, 120
    %v685 = vpop.permute.xlu0 %684
    %686 = vrot.lane.b32.xlu0 %v276, 120
    %v687 = vpop.permute.xlu0 %686
    %v688 = vsel %vm363, %v685, 0
    %v690 = vsel %vm363, %v687, 0
    %692 = vmatprep.subr.mxu0 0.0
    %693 = vmatpush1.xpose.msra.mxu0 0.0
    %694 = vmatprep.subr.mxu0 0.0
    %695 = vmatpush1.xpose.msra.mxu0 0.0
    %696 = vmatprep.subr.mxu0 0.0
    %697 = vmatpush1.xpose.msra.mxu0 0.0
    %698 = vmatprep.subr.mxu0 0.0
    %699 = vmatpush1.xpose.msra.mxu0 0.0
    %700 = vmatprep.subr.mxu0 0.0
    %701 = vmatpush1.xpose.msra.mxu0 0.0
    %702 = vmatprep.subr.mxu0 0.0
    %703 = vmatpush1.xpose.msra.mxu0 0.0
    %704 = vmatprep.subr.mxu0 0.0
    %705 = vmatpush1.xpose.msra.mxu0 0.0
    %706 = vmatprep.subr.mxu0 0.0
    %707 = vmatpush1.xpose.msra.mxu0 0.0
    %708 = vmatprep.subr.mxu0 0.0
    %709 = vmatpush1.xpose.msra.mxu0 0.0
    %710 = vmatprep.subr.mxu0 0.0
    %711 = vmatpush1.xpose.msra.mxu0 0.0
    %712 = vmatprep.subr.mxu0 0.0
    %713 = vmatpush1.xpose.msra.mxu0 0.0
    %714 = vmatprep.subr.mxu0 0.0
    %715 = vmatpush1.xpose.msra.mxu0 0.0
    %716 = vmatprep.subr.mxu0 0.0
    %717 = vmatpush1.xpose.msra.mxu0 0.0
    %718 = vmatprep.subr.mxu0 0.0
    %719 = vmatpush1.xpose.msra.mxu0 0.0
    %720 = vmatprep.subr.mxu0 0.0
    %721 = vmatpush1.xpose.msra.mxu0 0.0
    %722 = vmatprep.subr.mxu0 0.0
    %723 = vmatpush1.xpose.msra.mxu0 %v690
    %724 = vmatprep.subr.mxu0 0.0
    %725 = vmatpush2.xpose.msra.mxu0 0.0
    %726 = vmatprep.subr.mxu0 0.0
    %727 = vmatpush2.xpose.msra.mxu0 0.0
    %728 = vmatprep.subr.mxu0 0.0
    %729 = vmatpush2.xpose.msra.mxu0 0.0
    %730 = vmatprep.subr.mxu0 0.0
    %731 = vmatpush2.xpose.msra.mxu0 0.0
    %732 = vmatprep.subr.mxu0 0.0
    %733 = vmatpush2.xpose.msra.mxu0 0.0
    %734 = vmatprep.subr.mxu0 0.0
    %735 = vmatpush2.xpose.msra.mxu0 0.0
    %736 = vmatprep.subr.mxu0 0.0
    %737 = vmatpush2.xpose.msra.mxu0 0.0
    %738 = vmatprep.subr.mxu0 0.0
    %739 = vmatpush2.xpose.msra.mxu0 0.0
    %740 = vmatprep.subr.mxu0 0.0
    %741 = vmatpush2.xpose.msra.mxu0 0.0
    %742 = vmatprep.subr.mxu0 0.0
    %743 = vmatpush2.xpose.msra.mxu0 0.0
    %744 = vmatprep.subr.mxu0 0.0
    %745 = vmatpush2.xpose.msra.mxu0 0.0
    %746 = vmatprep.subr.mxu0 0.0
    %747 = vmatpush2.xpose.msra.mxu0 0.0
    %748 = vmatprep.subr.mxu0 0.0
    %749 = vmatpush2.xpose.msra.mxu0 0.0
    %750 = vmatprep.subr.mxu0 0.0
    %751 = vmatpush2.xpose.msra.mxu0 0.0
    %752 = vmatprep.subr.mxu0 0.0
    %753 = vmatpush2.xpose.msra.mxu0 0.0
    %754 = vmatprep.subr.mxu0 0.0
    %755 = vmatpush2.xpose.msra.mxu0 0.0
    %756 = vmatprep.mubr.f32.mxu0 0.0
    %757 = vmatmul.mubr.f32.gmra.mxu0 %v688
    %v758 = vpop.f32.mrf.mxu0
    %v759 = vadd.f32 0.0, %v758
    %v760 = vpop.f32.mrf.mxu0
    %761 = vdwg.mxu0
    %762 = vrot.lane.b32.xlu0 %v196, 120
    %v763 = vpop.permute.xlu0 %762
    %764 = vrot.lane.b32.xlu0 %v281, 120
    %v765 = vpop.permute.xlu0 %764
    %v766 = vsel %vm363, %v763, 0
    %v768 = vsel %vm363, %v765, 0
    %770 = vmatprep.subr.mxu0 0.0
    %771 = vmatpush1.xpose.msra.mxu0 0.0
    %772 = vmatprep.subr.mxu0 0.0
    %773 = vmatpush1.xpose.msra.mxu0 0.0
    %774 = vmatprep.subr.mxu0 0.0
    %775 = vmatpush1.xpose.msra.mxu0 0.0
    %776 = vmatprep.subr.mxu0 0.0
    %777 = vmatpush1.xpose.msra.mxu0 0.0
    %778 = vmatprep.subr.mxu0 0.0
    %779 = vmatpush1.xpose.msra.mxu0 0.0
    %780 = vmatprep.subr.mxu0 0.0
    %781 = vmatpush1.xpose.msra.mxu0 0.0
    %782 = vmatprep.subr.mxu0 0.0
    %783 = vmatpush1.xpose.msra.mxu0 0.0
    %784 = vmatprep.subr.mxu0 0.0
    %785 = vmatpush1.xpose.msra.mxu0 0.0
    %786 = vmatprep.subr.mxu0 0.0
    %787 = vmatpush1.xpose.msra.mxu0 0.0
    %788 = vmatprep.subr.mxu0 0.0
    %789 = vmatpush1.xpose.msra.mxu0 0.0
    %790 = vmatprep.subr.mxu0 0.0
    %791 = vmatpush1.xpose.msra.mxu0 0.0
    %792 = vmatprep.subr.mxu0 0.0
    %793 = vmatpush1.xpose.msra.mxu0 0.0
    %794 = vmatprep.subr.mxu0 0.0
    %795 = vmatpush1.xpose.msra.mxu0 0.0
    %796 = vmatprep.subr.mxu0 0.0
    %797 = vmatpush1.xpose.msra.mxu0 0.0
    %798 = vmatprep.subr.mxu0 0.0
    %799 = vmatpush1.xpose.msra.mxu0 0.0
    %800 = vmatprep.subr.mxu0 0.0
    %801 = vmatpush1.xpose.msra.mxu0 %v768
    %802 = vmatprep.subr.mxu0 0.0
    %803 = vmatpush2.xpose.msra.mxu0 0.0
    %804 = vmatprep.subr.mxu0 0.0
    %805 = vmatpush2.xpose.msra.mxu0 0.0
    %806 = vmatprep.subr.mxu0 0.0
    %807 = vmatpush2.xpose.msra.mxu0 0.0
    %808 = vmatprep.subr.mxu0 0.0
    %809 = vmatpush2.xpose.msra.mxu0 0.0
    %810 = vmatprep.subr.mxu0 0.0
    %811 = vmatpush2.xpose.msra.mxu0 0.0
    %812 = vmatprep.subr.mxu0 0.0
    %813 = vmatpush2.xpose.msra.mxu0 0.0
    %814 = vmatprep.subr.mxu0 0.0
    %815 = vmatpush2.xpose.msra.mxu0 0.0
    %816 = vmatprep.subr.mxu0 0.0
    %817 = vmatpush2.xpose.msra.mxu0 0.0
    %818 = vmatprep.subr.mxu0 0.0
    %819 = vmatpush2.xpose.msra.mxu0 0.0
    %820 = vmatprep.subr.mxu0 0.0
    %821 = vmatpush2.xpose.msra.mxu0 0.0
    %822 = vmatprep.subr.mxu0 0.0
    %823 = vmatpush2.xpose.msra.mxu0 0.0
    %824 = vmatprep.subr.mxu0 0.0
    %825 = vmatpush2.xpose.msra.mxu0 0.0
    %826 = vmatprep.subr.mxu0 0.0
    %827 = vmatpush2.xpose.msra.mxu0 0.0
    %828 = vmatprep.subr.mxu0 0.0
    %829 = vmatpush2.xpose.msra.mxu0 0.0
    %830 = vmatprep.subr.mxu0 0.0
    %831 = vmatpush2.xpose.msra.mxu0 0.0
    %832 = vmatprep.subr.mxu0 0.0
    %833 = vmatpush2.xpose.msra.mxu0 0.0
    %834 = vmatprep.mubr.f32.mxu0 0.0
    %835 = vmatmul.mubr.f32.gmra.mxu0 %v766
    %v836 = vpop.f32.mrf.mxu0
    %v837 = vadd.f32 0.0, %v836
    %v838 = vpop.f32.mrf.mxu0
    %839 = vdwg.mxu0
    %v840 = vsel %vm363, %v759, -inf
    %841 = vmax.xlane.f32.xlu0 %v840
    %v842 = vpop.xlane.xlu0 %841
    %v843 = vsel %vm363, %v837, -inf
    %844 = vmax.xlane.f32.xlu0 %v843
    %v845 = vpop.xlane.xlu0 %844
    %v846 = vsub.f32 %v759, %v842
    %v847 = vsub.f32 %v837, %v845
    %v848 = vmul.f32 %v846, 1.442695
    %v849 = vpow.pop %v848
    %v850 = vmul.f32 %v847, 1.442695
    %v851 = vpow.pop %v850
    %v852 = vsel %vm363, %v849, 0.0
    %853 = vadd.xlane.f32.xlu0 %v852
    %v854 = vpop.xlane.xlu0 %853
    %v855 = vsel %vm363, %v851, 0.0
    %856 = vadd.xlane.f32.xlu0 %v855
    %v857 = vpop.xlane.xlu0 %856
    %v858 = vrcp.pop %v854
    %v859 = vrcp.pop %v857
    %v860 = vmul.f32 %v849, %v858
    %v861 = vmul.f32 %v851, %v859
    %863 = vrot.lane.b32.xlu0 %v355, 120
    %v864 = vpop.permute.xlu0 %863
    %v867 = vsel %vm363, %v860, 0
    %869 = vmatprep.subr.mxu0 0.0
    %870 = vmatpush1.msra.mxu0 0.0
    %871 = vmatprep.subr.mxu0 0.0
    %872 = vmatpush1.msra.mxu0 0.0
    %873 = vmatprep.subr.mxu0 0.0
    %874 = vmatpush1.msra.mxu0 0.0
    %875 = vmatprep.subr.mxu0 0.0
    %876 = vmatpush1.msra.mxu0 0.0
    %877 = vmatprep.subr.mxu0 0.0
    %878 = vmatpush1.msra.mxu0 0.0
    %879 = vmatprep.subr.mxu0 0.0
    %880 = vmatpush1.msra.mxu0 0.0
    %881 = vmatprep.subr.mxu0 0.0
    %882 = vmatpush1.msra.mxu0 0.0
    %883 = vmatprep.subr.mxu0 0.0
    %884 = vmatpush1.msra.mxu0 0.0
    %885 = vmatprep.subr.mxu0 0.0
    %886 = vmatpush1.msra.mxu0 0.0
    %887 = vmatprep.subr.mxu0 0.0
    %888 = vmatpush1.msra.mxu0 0.0
    %889 = vmatprep.subr.mxu0 0.0
    %890 = vmatpush1.msra.mxu0 0.0
    %891 = vmatprep.subr.mxu0 0.0
    %892 = vmatpush1.msra.mxu0 0.0
    %893 = vmatprep.subr.mxu0 0.0
    %894 = vmatpush1.msra.mxu0 0.0
    %895 = vmatprep.subr.mxu0 0.0
    %896 = vmatpush1.msra.mxu0 0.0
    %897 = vmatprep.subr.mxu0 0.0
    %898 = vmatpush1.msra.mxu0 0.0
    %899 = vmatprep.subr.mxu0 0.0
    %900 = vmatpush1.msra.mxu0 %v864
    %901 = vmatprep.subr.mxu0 0.0
    %902 = vmatpush2.msra.mxu0 0.0
    %903 = vmatprep.subr.mxu0 0.0
    %904 = vmatpush2.msra.mxu0 0.0
    %905 = vmatprep.subr.mxu0 0.0
    %906 = vmatpush2.msra.mxu0 0.0
    %907 = vmatprep.subr.mxu0 0.0
    %908 = vmatpush2.msra.mxu0 0.0
    %909 = vmatprep.subr.mxu0 0.0
    %910 = vmatpush2.msra.mxu0 0.0
    %911 = vmatprep.subr.mxu0 0.0
    %912 = vmatpush2.msra.mxu0 0.0
    %913 = vmatprep.subr.mxu0 0.0
    %914 = vmatpush2.msra.mxu0 0.0
    %915 = vmatprep.subr.mxu0 0.0
    %916 = vmatpush2.msra.mxu0 0.0
    %917 = vmatprep.subr.mxu0 0.0
    %918 = vmatpush2.msra.mxu0 0.0
    %919 = vmatprep.subr.mxu0 0.0
    %920 = vmatpush2.msra.mxu0 0.0
    %921 = vmatprep.subr.mxu0 0.0
    %922 = vmatpush2.msra.mxu0 0.0
    %923 = vmatprep.subr.mxu0 0.0
    %924 = vmatpush2.msra.mxu0 0.0
    %925 = vmatprep.subr.mxu0 0.0
    %926 = vmatpush2.msra.mxu0 0.0
    %927 = vmatprep.subr.mxu0 0.0
    %928 = vmatpush2.msra.mxu0 0.0
    %929 = vmatprep.subr.mxu0 0.0
    %930 = vmatpush2.msra.mxu0 0.0
    %931 = vmatprep.subr.mxu0 0.0
    %932 = vmatpush2.msra.mxu0 0.0
    %933 = vmatprep.mubr.f32.mxu0 0.0
    %934 = vmatmul.mubr.f32.gmra.mxu0 %v867
    %v935 = vpop.f32.mrf.mxu0
    %v936 = vadd.f32 0.0, %v935
    %v937 = vpop.f32.mrf.mxu0
    %938 = vdwg.mxu0
    %940 = vrot.lane.b32.xlu0 %v360, 120
    %v941 = vpop.permute.xlu0 %940
    %v944 = vsel %vm363, %v861, 0
    %946 = vmatprep.subr.mxu0 0.0
    %947 = vmatpush1.msra.mxu0 0.0
    %948 = vmatprep.subr.mxu0 0.0
    %949 = vmatpush1.msra.mxu0 0.0
    %950 = vmatprep.subr.mxu0 0.0
    %951 = vmatpush1.msra.mxu0 0.0
    %952 = vmatprep.subr.mxu0 0.0
    %953 = vmatpush1.msra.mxu0 0.0
    %954 = vmatprep.subr.mxu0 0.0
    %955 = vmatpush1.msra.mxu0 0.0
    %956 = vmatprep.subr.mxu0 0.0
    %957 = vmatpush1.msra.mxu0 0.0
    %958 = vmatprep.subr.mxu0 0.0
    %959 = vmatpush1.msra.mxu0 0.0
    %960 = vmatprep.subr.mxu0 0.0
    %961 = vmatpush1.msra.mxu0 0.0
    %962 = vmatprep.subr.mxu0 0.0
    %963 = vmatpush1.msra.mxu0 0.0
    %964 = vmatprep.subr.mxu0 0.0
    %965 = vmatpush1.msra.mxu0 0.0
    %966 = vmatprep.subr.mxu0 0.0
    %967 = vmatpush1.msra.mxu0 0.0
    %968 = vmatprep.subr.mxu0 0.0
    %969 = vmatpush1.msra.mxu0 0.0
    %970 = vmatprep.subr.mxu0 0.0
    %971 = vmatpush1.msra.mxu0 0.0
    %972 = vmatprep.subr.mxu0 0.0
    %973 = vmatpush1.msra.mxu0 0.0
    %974 = vmatprep.subr.mxu0 0.0
    %975 = vmatpush1.msra.mxu0 0.0
    %976 = vmatprep.subr.mxu0 0.0
    %977 = vmatpush1.msra.mxu0 %v941
    %978 = vmatprep.subr.mxu0 0.0
    %979 = vmatpush2.msra.mxu0 0.0
    %980 = vmatprep.subr.mxu0 0.0
    %981 = vmatpush2.msra.mxu0 0.0
    %982 = vmatprep.subr.mxu0 0.0
    %983 = vmatpush2.msra.mxu0 0.0
    %984 = vmatprep.subr.mxu0 0.0
    %985 = vmatpush2.msra.mxu0 0.0
    %986 = vmatprep.subr.mxu0 0.0
    %987 = vmatpush2.msra.mxu0 0.0
    %988 = vmatprep.subr.mxu0 0.0
    %989 = vmatpush2.msra.mxu0 0.0
    %990 = vmatprep.subr.mxu0 0.0
    %991 = vmatpush2.msra.mxu0 0.0
    %992 = vmatprep.subr.mxu0 0.0
    %993 = vmatpush2.msra.mxu0 0.0
    %994 = vmatprep.subr.mxu0 0.0
    %995 = vmatpush2.msra.mxu0 0.0
    %996 = vmatprep.subr.mxu0 0.0
    %997 = vmatpush2.msra.mxu0 0.0
    %998 = vmatprep.subr.mxu0 0.0
    %999 = vmatpush2.msra.mxu0 0.0
    %1000 = vmatprep.subr.mxu0 0.0
    %1001 = vmatpush2.msra.mxu0 0.0
    %1002 = vmatprep.subr.mxu0 0.0
    %1003 = vmatpush2.msra.mxu0 0.0
    %1004 = vmatprep.subr.mxu0 0.0
    %1005 = vmatpush2.msra.mxu0 0.0
    %1006 = vmatprep.subr.mxu0 0.0
    %1007 = vmatpush2.msra.mxu0 0.0
    %1008 = vmatprep.subr.mxu0 0.0
    %1009 = vmatpush2.msra.mxu0 0.0
    %1010 = vmatprep.mubr.f32.mxu0 0.0
    %1011 = vmatmul.mubr.f32.gmra.mxu0 %v944
    %v1012 = vpop.f32.mrf.mxu0
    %v1013 = vadd.f32 0.0, %v1012
    %v1014 = vpop.f32.mrf.mxu0
    %1015 = vdwg.mxu0
    %1016 = vrot.lane.b32.xlu0 %v191, 112
    %v1017 = vpop.permute.xlu0 %1016
    %1018 = vrot.lane.b32.xlu0 %v276, 112
    %v1019 = vpop.permute.xlu0 %1018
    %v1020 = vsel %vm363, %v1017, 0
    %v1022 = vsel %vm363, %v1019, 0
    %1024 = vmatprep.subr.mxu0 0.0
    %1025 = vmatpush1.xpose.msra.mxu0 0.0
    %1026 = vmatprep.subr.mxu0 0.0
    %1027 = vmatpush1.xpose.msra.mxu0 0.0
    %1028 = vmatprep.subr.mxu0 0.0
    %1029 = vmatpush1.xpose.msra.mxu0 0.0
    %1030 = vmatprep.subr.mxu0 0.0
    %1031 = vmatpush1.xpose.msra.mxu0 0.0
    %1032 = vmatprep.subr.mxu0 0.0
    %1033 = vmatpush1.xpose.msra.mxu0 0.0
    %1034 = vmatprep.subr.mxu0 0.0
    %1035 = vmatpush1.xpose.msra.mxu0 0.0
    %1036 = vmatprep.subr.mxu0 0.0
    %1037 = vmatpush1.xpose.msra.mxu0 0.0
    %1038 = vmatprep.subr.mxu0 0.0
    %1039 = vmatpush1.xpose.msra.mxu0 0.0
    %1040 = vmatprep.subr.mxu0 0.0
    %1041 = vmatpush1.xpose.msra.mxu0 0.0
    %1042 = vmatprep.subr.mxu0 0.0
    %1043 = vmatpush1.xpose.msra.mxu0 0.0
    %1044 = vmatprep.subr.mxu0 0.0
    %1045 = vmatpush1.xpose.msra.mxu0 0.0
    %1046 = vmatprep.subr.mxu0 0.0
    %1047 = vmatpush1.xpose.msra.mxu0 0.0
    %1048 = vmatprep.subr.mxu0 0.0
    %1049 = vmatpush1.xpose.msra.mxu0 0.0
    %1050 = vmatprep.subr.mxu0 0.0
    %1051 = vmatpush1.xpose.msra.mxu0 0.0
    %1052 = vmatprep.subr.mxu0 0.0
    %1053 = vmatpush1.xpose.msra.mxu0 0.0
    %1054 = vmatprep.subr.mxu0 0.0
    %1055 = vmatpush1.xpose.msra.mxu0 %v1022
    %1056 = vmatprep.subr.mxu0 0.0
    %1057 = vmatpush2.xpose.msra.mxu0 0.0
    %1058 = vmatprep.subr.mxu0 0.0
    %1059 = vmatpush2.xpose.msra.mxu0 0.0
    %1060 = vmatprep.subr.mxu0 0.0
    %1061 = vmatpush2.xpose.msra.mxu0 0.0
    %1062 = vmatprep.subr.mxu0 0.0
    %1063 = vmatpush2.xpose.msra.mxu0 0.0
    %1064 = vmatprep.subr.mxu0 0.0
    %1065 = vmatpush2.xpose.msra.mxu0 0.0
    %1066 = vmatprep.subr.mxu0 0.0
    %1067 = vmatpush2.xpose.msra.mxu0 0.0
    %1068 = vmatprep.subr.mxu0 0.0
    %1069 = vmatpush2.xpose.msra.mxu0 0.0
    %1070 = vmatprep.subr.mxu0 0.0
    %1071 = vmatpush2.xpose.msra.mxu0 0.0
    %1072 = vmatprep.subr.mxu0 0.0
    %1073 = vmatpush2.xpose.msra.mxu0 0.0
    %1074 = vmatprep.subr.mxu0 0.0
    %1075 = vmatpush2.xpose.msra.mxu0 0.0
    %1076 = vmatprep.subr.mxu0 0.0
    %1077 = vmatpush2.xpose.msra.mxu0 0.0
    %1078 = vmatprep.subr.mxu0 0.0
    %1079 = vmatpush2.xpose.msra.mxu0 0.0
    %1080 = vmatprep.subr.mxu0 0.0
    %1081 = vmatpush2.xpose.msra.mxu0 0.0
    %1082 = vmatprep.subr.mxu0 0.0
    %1083 = vmatpush2.xpose.msra.mxu0 0.0
    %1084 = vmatprep.subr.mxu0 0.0
    %1085 = vmatpush2.xpose.msra.mxu0 0.0
    %1086 = vmatprep.subr.mxu0 0.0
    %1087 = vmatpush2.xpose.msra.mxu0 0.0
    %1088 = vmatprep.mubr.f32.mxu0 0.0
    %1089 = vmatmul.mubr.f32.gmra.mxu0 %v1020
    %v1090 = vpop.f32.mrf.mxu0
    %v1091 = vadd.f32 0.0, %v1090
    %v1092 = vpop.f32.mrf.mxu0
    %1093 = vdwg.mxu0
    %1094 = vrot.lane.b32.xlu0 %v196, 112
    %v1095 = vpop.permute.xlu0 %1094
    %1096 = vrot.lane.b32.xlu0 %v281, 112
    %v1097 = vpop.permute.xlu0 %1096
    %v1098 = vsel %vm363, %v1095, 0
    %v1100 = vsel %vm363, %v1097, 0
    %1102 = vmatprep.subr.mxu0 0.0
    %1103 = vmatpush1.xpose.msra.mxu0 0.0
    %1104 = vmatprep.subr.mxu0 0.0
    %1105 = vmatpush1.xpose.msra.mxu0 0.0
    %1106 = vmatprep.subr.mxu0 0.0
    %1107 = vmatpush1.xpose.msra.mxu0 0.0
    %1108 = vmatprep.subr.mxu0 0.0
    %1109 = vmatpush1.xpose.msra.mxu0 0.0
    %1110 = vmatprep.subr.mxu0 0.0
    %1111 = vmatpush1.xpose.msra.mxu0 0.0
    %1112 = vmatprep.subr.mxu0 0.0
    %1113 = vmatpush1.xpose.msra.mxu0 0.0
    %1114 = vmatprep.subr.mxu0 0.0
    %1115 = vmatpush1.xpose.msra.mxu0 0.0
    %1116 = vmatprep.subr.mxu0 0.0
    %1117 = vmatpush1.xpose.msra.mxu0 0.0
    %1118 = vmatprep.subr.mxu0 0.0
    %1119 = vmatpush1.xpose.msra.mxu0 0.0
    %1120 = vmatprep.subr.mxu0 0.0
    %1121 = vmatpush1.xpose.msra.mxu0 0.0
    %1122 = vmatprep.subr.mxu0 0.0
    %1123 = vmatpush1.xpose.msra.mxu0 0.0
    %1124 = vmatprep.subr.mxu0 0.0
    %1125 = vmatpush1.xpose.msra.mxu0 0.0
    %1126 = vmatprep.subr.mxu0 0.0
    %1127 = vmatpush1.xpose.msra.mxu0 0.0
    %1128 = vmatprep.subr.mxu0 0.0
    %1129 = vmatpush1.xpose.msra.mxu0 0.0
    %1130 = vmatprep.subr.mxu0 0.0
    %1131 = vmatpush1.xpose.msra.mxu0 0.0
    %1132 = vmatprep.subr.mxu0 0.0
    %1133 = vmatpush1.xpose.msra.mxu0 %v1100
    %1134 = vmatprep.subr.mxu0 0.0
    %1135 = vmatpush2.xpose.msra.mxu0 0.0
    %1136 = vmatprep.subr.mxu0 0.0
    %1137 = vmatpush2.xpose.msra.mxu0 0.0
    %1138 = vmatprep.subr.mxu0 0.0
    %1139 = vmatpush2.xpose.msra.mxu0 0.0
    %1140 = vmatprep.subr.mxu0 0.0
    %1141 = vmatpush2.xpose.msra.mxu0 0.0
    %1142 = vmatprep.subr.mxu0 0.0
    %1143 = vmatpush2.xpose.msra.mxu0 0.0
    %1144 = vmatprep.subr.mxu0 0.0
    %1145 = vmatpush2.xpose.msra.mxu0 0.0
    %1146 = vmatprep.subr.mxu0 0.0
    %1147 = vmatpush2.xpose.msra.mxu0 0.0
    %1148 = vmatprep.subr.mxu0 0.0
    %1149 = vmatpush2.xpose.msra.mxu0 0.0
    %1150 = vmatprep.subr.mxu0 0.0
    %1151 = vmatpush2.xpose.msra.mxu0 0.0
    %1152 = vmatprep.subr.mxu0 0.0
    %1153 = vmatpush2.xpose.msra.mxu0 0.0
    %1154 = vmatprep.subr.mxu0 0.0
    %1155 = vmatpush2.xpose.msra.mxu0 0.0
    %1156 = vmatprep.subr.mxu0 0.0
    %1157 = vmatpush2.xpose.msra.mxu0 0.0
    %1158 = vmatprep.subr.mxu0 0.0
    %1159 = vmatpush2.xpose.msra.mxu0 0.0
    %1160 = vmatprep.subr.mxu0 0.0
    %1161 = vmatpush2.xpose.msra.mxu0 0.0
    %1162 = vmatprep.subr.mxu0 0.0
    %1163 = vmatpush2.xpose.msra.mxu0 0.0
    %1164 = vmatprep.subr.mxu0 0.0
    %1165 = vmatpush2.xpose.msra.mxu0 0.0
    %1166 = vmatprep.mubr.f32.mxu0 0.0
    %1167 = vmatmul.mubr.f32.gmra.mxu0 %v1098
    %v1168 = vpop.f32.mrf.mxu0
    %v1169 = vadd.f32 0.0, %v1168
    %v1170 = vpop.f32.mrf.mxu0
    %1171 = vdwg.mxu0
    %v1172 = vsel %vm363, %v1091, -inf
    %1173 = vmax.xlane.f32.xlu0 %v1172
    %v1174 = vpop.xlane.xlu0 %1173
    %v1175 = vsel %vm363, %v1169, -inf
    %1176 = vmax.xlane.f32.xlu0 %v1175
    %v1177 = vpop.xlane.xlu0 %1176
    %v1178 = vsub.f32 %v1091, %v1174
    %v1179 = vsub.f32 %v1169, %v1177
    %v1180 = vmul.f32 %v1178, 1.442695
    %v1181 = vpow.pop %v1180
    %v1182 = vmul.f32 %v1179, 1.442695
    %v1183 = vpow.pop %v1182
    %v1184 = vsel %vm363, %v1181, 0.0
    %1185 = vadd.xlane.f32.xlu0 %v1184
    %v1186 = vpop.xlane.xlu0 %1185
    %v1187 = vsel %vm363, %v1183, 0.0
    %1188 = vadd.xlane.f32.xlu0 %v1187
    %v1189 = vpop.xlane.xlu0 %1188
    %v1190 = vrcp.pop %v1186
    %v1191 = vrcp.pop %v1189
    %v1192 = vmul.f32 %v1181, %v1190
    %v1193 = vmul.f32 %v1183, %v1191
    %1194 = vrot.lane.b32.xlu0 %v355, 112
    %v1195 = vpop.permute.xlu0 %1194
    %v1198 = vsel %vm363, %v1192, 0
    %1200 = vmatprep.subr.mxu0 0.0
    %1201 = vmatpush1.msra.mxu0 0.0
    %1202 = vmatprep.subr.mxu0 0.0
    %1203 = vmatpush1.msra.mxu0 0.0
    %1204 = vmatprep.subr.mxu0 0.0
    %1205 = vmatpush1.msra.mxu0 0.0
    %1206 = vmatprep.subr.mxu0 0.0
    %1207 = vmatpush1.msra.mxu0 0.0
    %1208 = vmatprep.subr.mxu0 0.0
    %1209 = vmatpush1.msra.mxu0 0.0
    %1210 = vmatprep.subr.mxu0 0.0
    %1211 = vmatpush1.msra.mxu0 0.0
    %1212 = vmatprep.subr.mxu0 0.0
    %1213 = vmatpush1.msra.mxu0 0.0
    %1214 = vmatprep.subr.mxu0 0.0
    %1215 = vmatpush1.msra.mxu0 0.0
    %1216 = vmatprep.subr.mxu0 0.0
    %1217 = vmatpush1.msra.mxu0 0.0
    %1218 = vmatprep.subr.mxu0 0.0
    %1219 = vmatpush1.msra.mxu0 0.0
    %1220 = vmatprep.subr.mxu0 0.0
    %1221 = vmatpush1.msra.mxu0 0.0
    %1222 = vmatprep.subr.mxu0 0.0
    %1223 = vmatpush1.msra.mxu0 0.0
    %1224 = vmatprep.subr.mxu0 0.0
    %1225 = vmatpush1.msra.mxu0 0.0
    %1226 = vmatprep.subr.mxu0 0.0
    %1227 = vmatpush1.msra.mxu0 0.0
    %1228 = vmatprep.subr.mxu0 0.0
    %1229 = vmatpush1.msra.mxu0 0.0
    %1230 = vmatprep.subr.mxu0 0.0
    %1231 = vmatpush1.msra.mxu0 %v1195
    %1232 = vmatprep.subr.mxu0 0.0
    %1233 = vmatpush2.msra.mxu0 0.0
    %1234 = vmatprep.subr.mxu0 0.0
    %1235 = vmatpush2.msra.mxu0 0.0
    %1236 = vmatprep.subr.mxu0 0.0
    %1237 = vmatpush2.msra.mxu0 0.0
    %1238 = vmatprep.subr.mxu0 0.0
    %1239 = vmatpush2.msra.mxu0 0.0
    %1240 = vmatprep.subr.mxu0 0.0
    %1241 = vmatpush2.msra.mxu0 0.0
    %1242 = vmatprep.subr.mxu0 0.0
    %1243 = vmatpush2.msra.mxu0 0.0
    %1244 = vmatprep.subr.mxu0 0.0
    %1245 = vmatpush2.msra.mxu0 0.0
    %1246 = vmatprep.subr.mxu0 0.0
    %1247 = vmatpush2.msra.mxu0 0.0
    %1248 = vmatprep.subr.mxu0 0.0
    %1249 = vmatpush2.msra.mxu0 0.0
    %1250 = vmatprep.subr.mxu0 0.0
    %1251 = vmatpush2.msra.mxu0 0.0
    %1252 = vmatprep.subr.mxu0 0.0
    %1253 = vmatpush2.msra.mxu0 0.0
    %1254 = vmatprep.subr.mxu0 0.0
    %1255 = vmatpush2.msra.mxu0 0.0
    %1256 = vmatprep.subr.mxu0 0.0
    %1257 = vmatpush2.msra.mxu0 0.0
    %1258 = vmatprep.subr.mxu0 0.0
    %1259 = vmatpush2.msra.mxu0 0.0
    %1260 = vmatprep.subr.mxu0 0.0
    %1261 = vmatpush2.msra.mxu0 0.0
    %1262 = vmatprep.subr.mxu0 0.0
    %1263 = vmatpush2.msra.mxu0 0.0
    %1264 = vmatprep.mubr.f32.mxu0 0.0
    %1265 = vmatmul.mubr.f32.gmra.mxu0 %v1198
    %v1266 = vpop.f32.mrf.mxu0
    %v1267 = vadd.f32 0.0, %v1266
    %v1268 = vpop.f32.mrf.mxu0
    %1269 = vdwg.mxu0
    %1270 = vrot.lane.b32.xlu0 %v360, 112
    %v1271 = vpop.permute.xlu0 %1270
    %v1274 = vsel %vm363, %v1193, 0
    %1276 = vmatprep.subr.mxu0 0.0
    %1277 = vmatpush1.msra.mxu0 0.0
    %1278 = vmatprep.subr.mxu0 0.0
    %1279 = vmatpush1.msra.mxu0 0.0
    %1280 = vmatprep.subr.mxu0 0.0
    %1281 = vmatpush1.msra.mxu0 0.0
    %1282 = vmatprep.subr.mxu0 0.0
    %1283 = vmatpush1.msra.mxu0 0.0
    %1284 = vmatprep.subr.mxu0 0.0
    %1285 = vmatpush1.msra.mxu0 0.0
    %1286 = vmatprep.subr.mxu0 0.0
    %1287 = vmatpush1.msra.mxu0 0.0
    %1288 = vmatprep.subr.mxu0 0.0
    %1289 = vmatpush1.msra.mxu0 0.0
    %1290 = vmatprep.subr.mxu0 0.0
    %1291 = vmatpush1.msra.mxu0 0.0
    %1292 = vmatprep.subr.mxu0 0.0
    %1293 = vmatpush1.msra.mxu0 0.0
    %1294 = vmatprep.subr.mxu0 0.0
    %1295 = vmatpush1.msra.mxu0 0.0
    %1296 = vmatprep.subr.mxu0 0.0
    %1297 = vmatpush1.msra.mxu0 0.0
    %1298 = vmatprep.subr.mxu0 0.0
    %1299 = vmatpush1.msra.mxu0 0.0
    %1300 = vmatprep.subr.mxu0 0.0
    %1301 = vmatpush1.msra.mxu0 0.0
    %1302 = vmatprep.subr.mxu0 0.0
    %1303 = vmatpush1.msra.mxu0 0.0
    %1304 = vmatprep.subr.mxu0 0.0
    %1305 = vmatpush1.msra.mxu0 0.0
    %1306 = vmatprep.subr.mxu0 0.0
    %1307 = vmatpush1.msra.mxu0 %v1271
    %1308 = vmatprep.subr.mxu0 0.0
    %1309 = vmatpush2.msra.mxu0 0.0
    %1310 = vmatprep.subr.mxu0 0.0
    %1311 = vmatpush2.msra.mxu0 0.0
    %1312 = vmatprep.subr.mxu0 0.0
    %1313 = vmatpush2.msra.mxu0 0.0
    %1314 = vmatprep.subr.mxu0 0.0
    %1315 = vmatpush2.msra.mxu0 0.0
    %1316 = vmatprep.subr.mxu0 0.0
    %1317 = vmatpush2.msra.mxu0 0.0
    %1318 = vmatprep.subr.mxu0 0.0
    %1319 = vmatpush2.msra.mxu0 0.0
    %1320 = vmatprep.subr.mxu0 0.0
    %1321 = vmatpush2.msra.mxu0 0.0
    %1322 = vmatprep.subr.mxu0 0.0
    %1323 = vmatpush2.msra.mxu0 0.0
    %1324 = vmatprep.subr.mxu0 0.0
    %1325 = vmatpush2.msra.mxu0 0.0
    %1326 = vmatprep.subr.mxu0 0.0
    %1327 = vmatpush2.msra.mxu0 0.0
    %1328 = vmatprep.subr.mxu0 0.0
    %1329 = vmatpush2.msra.mxu0 0.0
    %1330 = vmatprep.subr.mxu0 0.0
    %1331 = vmatpush2.msra.mxu0 0.0
    %1332 = vmatprep.subr.mxu0 0.0
    %1333 = vmatpush2.msra.mxu0 0.0
    %1334 = vmatprep.subr.mxu0 0.0
    %1335 = vmatpush2.msra.mxu0 0.0
    %1336 = vmatprep.subr.mxu0 0.0
    %1337 = vmatpush2.msra.mxu0 0.0
    %1338 = vmatprep.subr.mxu0 0.0
    %1339 = vmatpush2.msra.mxu0 0.0
    %1340 = vmatprep.mubr.f32.mxu0 0.0
    %1341 = vmatmul.mubr.f32.gmra.mxu0 %v1274
    %v1342 = vpop.f32.mrf.mxu0
    %v1343 = vadd.f32 0.0, %v1342
    %v1344 = vpop.f32.mrf.mxu0
    %1345 = vdwg.mxu0
    %1346 = vrot.lane.b32.xlu0 %v191, 104
    %v1347 = vpop.permute.xlu0 %1346
    %1348 = vrot.lane.b32.xlu0 %v276, 104
    %v1349 = vpop.permute.xlu0 %1348
    %v1350 = vsel %vm363, %v1347, 0
    %v1352 = vsel %vm363, %v1349, 0
    %1354 = vmatprep.subr.mxu0 0.0
    %1355 = vmatpush1.xpose.msra.mxu0 0.0
    %1356 = vmatprep.subr.mxu0 0.0
    %1357 = vmatpush1.xpose.msra.mxu0 0.0
    %1358 = vmatprep.subr.mxu0 0.0
    %1359 = vmatpush1.xpose.msra.mxu0 0.0
    %1360 = vmatprep.subr.mxu0 0.0
    %1361 = vmatpush1.xpose.msra.mxu0 0.0
    %1362 = vmatprep.subr.mxu0 0.0
    %1363 = vmatpush1.xpose.msra.mxu0 0.0
    %1364 = vmatprep.subr.mxu0 0.0
    %1365 = vmatpush1.xpose.msra.mxu0 0.0
    %1366 = vmatprep.subr.mxu0 0.0
    %1367 = vmatpush1.xpose.msra.mxu0 0.0
    %1368 = vmatprep.subr.mxu0 0.0
    %1369 = vmatpush1.xpose.msra.mxu0 0.0
    %1370 = vmatprep.subr.mxu0 0.0
    %1371 = vmatpush1.xpose.msra.mxu0 0.0
    %1372 = vmatprep.subr.mxu0 0.0
    %1373 = vmatpush1.xpose.msra.mxu0 0.0
    %1374 = vmatprep.subr.mxu0 0.0
    %1375 = vmatpush1.xpose.msra.mxu0 0.0
    %1376 = vmatprep.subr.mxu0 0.0
    %1377 = vmatpush1.xpose.msra.mxu0 0.0
    %1378 = vmatprep.subr.mxu0 0.0
    %1379 = vmatpush1.xpose.msra.mxu0 0.0
    %1380 = vmatprep.subr.mxu0 0.0
    %1381 = vmatpush1.xpose.msra.mxu0 0.0
    %1382 = vmatprep.subr.mxu0 0.0
    %1383 = vmatpush1.xpose.msra.mxu0 0.0
    %1384 = vmatprep.subr.mxu0 0.0
    %1385 = vmatpush1.xpose.msra.mxu0 %v1352
    %1386 = vmatprep.subr.mxu0 0.0
    %1387 = vmatpush2.xpose.msra.mxu0 0.0
    %1388 = vmatprep.subr.mxu0 0.0
    %1389 = vmatpush2.xpose.msra.mxu0 0.0
    %1390 = vmatprep.subr.mxu0 0.0
    %1391 = vmatpush2.xpose.msra.mxu0 0.0
    %1392 = vmatprep.subr.mxu0 0.0
    %1393 = vmatpush2.xpose.msra.mxu0 0.0
    %1394 = vmatprep.subr.mxu0 0.0
    %1395 = vmatpush2.xpose.msra.mxu0 0.0
    %1396 = vmatprep.subr.mxu0 0.0
    %1397 = vmatpush2.xpose.msra.mxu0 0.0
    %1398 = vmatprep.subr.mxu0 0.0
    %1399 = vmatpush2.xpose.msra.mxu0 0.0
    %1400 = vmatprep.subr.mxu0 0.0
    %1401 = vmatpush2.xpose.msra.mxu0 0.0
    %1402 = vmatprep.subr.mxu0 0.0
    %1403 = vmatpush2.xpose.msra.mxu0 0.0
    %1404 = vmatprep.subr.mxu0 0.0
    %1405 = vmatpush2.xpose.msra.mxu0 0.0
    %1406 = vmatprep.subr.mxu0 0.0
    %1407 = vmatpush2.xpose.msra.mxu0 0.0
    %1408 = vmatprep.subr.mxu0 0.0
    %1409 = vmatpush2.xpose.msra.mxu0 0.0
    %1410 = vmatprep.subr.mxu0 0.0
    %1411 = vmatpush2.xpose.msra.mxu0 0.0
    %1412 = vmatprep.subr.mxu0 0.0
    %1413 = vmatpush2.xpose.msra.mxu0 0.0
    %1414 = vmatprep.subr.mxu0 0.0
    %1415 = vmatpush2.xpose.msra.mxu0 0.0
    %1416 = vmatprep.subr.mxu0 0.0
    %1417 = vmatpush2.xpose.msra.mxu0 0.0
    %1418 = vmatprep.mubr.f32.mxu0 0.0
    %1419 = vmatmul.mubr.f32.gmra.mxu0 %v1350
    %v1420 = vpop.f32.mrf.mxu0
    %v1421 = vadd.f32 0.0, %v1420
    %v1422 = vpop.f32.mrf.mxu0
    %1423 = vdwg.mxu0
    %1424 = vrot.lane.b32.xlu0 %v196, 104
    %v1425 = vpop.permute.xlu0 %1424
    %1426 = vrot.lane.b32.xlu0 %v281, 104
    %v1427 = vpop.permute.xlu0 %1426
    %v1428 = vsel %vm363, %v1425, 0
    %v1430 = vsel %vm363, %v1427, 0
    %1432 = vmatprep.subr.mxu0 0.0
    %1433 = vmatpush1.xpose.msra.mxu0 0.0
    %1434 = vmatprep.subr.mxu0 0.0
    %1435 = vmatpush1.xpose.msra.mxu0 0.0
    %1436 = vmatprep.subr.mxu0 0.0
    %1437 = vmatpush1.xpose.msra.mxu0 0.0
    %1438 = vmatprep.subr.mxu0 0.0
    %1439 = vmatpush1.xpose.msra.mxu0 0.0
    %1440 = vmatprep.subr.mxu0 0.0
    %1441 = vmatpush1.xpose.msra.mxu0 0.0
    %1442 = vmatprep.subr.mxu0 0.0
    %1443 = vmatpush1.xpose.msra.mxu0 0.0
    %1444 = vmatprep.subr.mxu0 0.0
    %1445 = vmatpush1.xpose.msra.mxu0 0.0
    %1446 = vmatprep.subr.mxu0 0.0
    %1447 = vmatpush1.xpose.msra.mxu0 0.0
    %1448 = vmatprep.subr.mxu0 0.0
    %1449 = vmatpush1.xpose.msra.mxu0 0.0
    %1450 = vmatprep.subr.mxu0 0.0
    %1451 = vmatpush1.xpose.msra.mxu0 0.0
    %1452 = vmatprep.subr.mxu0 0.0
    %1453 = vmatpush1.xpose.msra.mxu0 0.0
    %1454 = vmatprep.subr.mxu0 0.0
    %1455 = vmatpush1.xpose.msra.mxu0 0.0
    %1456 = vmatprep.subr.mxu0 0.0
    %1457 = vmatpush1.xpose.msra.mxu0 0.0
    %1458 = vmatprep.subr.mxu0 0.0
    %1459 = vmatpush1.xpose.msra.mxu0 0.0
    %1460 = vmatprep.subr.mxu0 0.0
    %1461 = vmatpush1.xpose.msra.mxu0 0.0
    %1462 = vmatprep.subr.mxu0 0.0
    %1463 = vmatpush1.xpose.msra.mxu0 %v1430
    %1464 = vmatprep.subr.mxu0 0.0
    %1465 = vmatpush2.xpose.msra.mxu0 0.0
    %1466 = vmatprep.subr.mxu0 0.0
    %1467 = vmatpush2.xpose.msra.mxu0 0.0
    %1468 = vmatprep.subr.mxu0 0.0
    %1469 = vmatpush2.xpose.msra.mxu0 0.0
    %1470 = vmatprep.subr.mxu0 0.0
    %1471 = vmatpush2.xpose.msra.mxu0 0.0
    %1472 = vmatprep.subr.mxu0 0.0
    %1473 = vmatpush2.xpose.msra.mxu0 0.0
    %1474 = vmatprep.subr.mxu0 0.0
    %1475 = vmatpush2.xpose.msra.mxu0 0.0
    %1476 = vmatprep.subr.mxu0 0.0
    %1477 = vmatpush2.xpose.msra.mxu0 0.0
    %1478 = vmatprep.subr.mxu0 0.0
    %1479 = vmatpush2.xpose.msra.mxu0 0.0
    %1480 = vmatprep.subr.mxu0 0.0
    %1481 = vmatpush2.xpose.msra.mxu0 0.0
    %1482 = vmatprep.subr.mxu0 0.0
    %1483 = vmatpush2.xpose.msra.mxu0 0.0
    %1484 = vmatprep.subr.mxu0 0.0
    %1485 = vmatpush2.xpose.msra.mxu0 0.0
    %1486 = vmatprep.subr.mxu0 0.0
    %1487 = vmatpush2.xpose.msra.mxu0 0.0
    %1488 = vmatprep.subr.mxu0 0.0
    %1489 = vmatpush2.xpose.msra.mxu0 0.0
    %1490 = vmatprep.subr.mxu0 0.0
    %1491 = vmatpush2.xpose.msra.mxu0 0.0
    %1492 = vmatprep.subr.mxu0 0.0
    %1493 = vmatpush2.xpose.msra.mxu0 0.0
    %1494 = vmatprep.subr.mxu0 0.0
    %1495 = vmatpush2.xpose.msra.mxu0 0.0
    %1496 = vmatprep.mubr.f32.mxu0 0.0
    %1497 = vmatmul.mubr.f32.gmra.mxu0 %v1428
    %v1498 = vpop.f32.mrf.mxu0
    %v1499 = vadd.f32 0.0, %v1498
    %v1500 = vpop.f32.mrf.mxu0
    %1501 = vdwg.mxu0
    %v1502 = vsel %vm363, %v1421, -inf
    %1503 = vmax.xlane.f32.xlu0 %v1502
    %v1504 = vpop.xlane.xlu0 %1503
    %v1505 = vsel %vm363, %v1499, -inf
    %1506 = vmax.xlane.f32.xlu0 %v1505
    %v1507 = vpop.xlane.xlu0 %1506
    %v1508 = vsub.f32 %v1421, %v1504
    %v1509 = vsub.f32 %v1499, %v1507
    %v1510 = vmul.f32 %v1508, 1.442695
    %v1511 = vpow.pop %v1510
    %v1512 = vmul.f32 %v1509, 1.442695
    %v1513 = vpow.pop %v1512
    %v1514 = vsel %vm363, %v1511, 0.0
    %1515 = vadd.xlane.f32.xlu0 %v1514
    %v1516 = vpop.xlane.xlu0 %1515
    %v1517 = vsel %vm363, %v1513, 0.0
    %1518 = vadd.xlane.f32.xlu0 %v1517
    %v1519 = vpop.xlane.xlu0 %1518
    %v1520 = vrcp.pop %v1516
    %v1521 = vrcp.pop %v1519
    %v1522 = vmul.f32 %v1511, %v1520
    %v1523 = vmul.f32 %v1513, %v1521
    %1524 = vrot.lane.b32.xlu0 %v355, 104
    %v1525 = vpop.permute.xlu0 %1524
    %v1528 = vsel %vm363, %v1522, 0
    %1530 = vmatprep.subr.mxu0 0.0
    %1531 = vmatpush1.msra.mxu0 0.0
    %1532 = vmatprep.subr.mxu0 0.0
    %1533 = vmatpush1.msra.mxu0 0.0
    %1534 = vmatprep.subr.mxu0 0.0
    %1535 = vmatpush1.msra.mxu0 0.0
    %1536 = vmatprep.subr.mxu0 0.0
    %1537 = vmatpush1.msra.mxu0 0.0
    %1538 = vmatprep.subr.mxu0 0.0
    %1539 = vmatpush1.msra.mxu0 0.0
    %1540 = vmatprep.subr.mxu0 0.0
    %1541 = vmatpush1.msra.mxu0 0.0
    %1542 = vmatprep.subr.mxu0 0.0
    %1543 = vmatpush1.msra.mxu0 0.0
    %1544 = vmatprep.subr.mxu0 0.0
    %1545 = vmatpush1.msra.mxu0 0.0
    %1546 = vmatprep.subr.mxu0 0.0
    %1547 = vmatpush1.msra.mxu0 0.0
    %1548 = vmatprep.subr.mxu0 0.0
    %1549 = vmatpush1.msra.mxu0 0.0
    %1550 = vmatprep.subr.mxu0 0.0
    %1551 = vmatpush1.msra.mxu0 0.0
    %1552 = vmatprep.subr.mxu0 0.0
    %1553 = vmatpush1.msra.mxu0 0.0
    %1554 = vmatprep.subr.mxu0 0.0
    %1555 = vmatpush1.msra.mxu0 0.0
    %1556 = vmatprep.subr.mxu0 0.0
    %1557 = vmatpush1.msra.mxu0 0.0
    %1558 = vmatprep.subr.mxu0 0.0
    %1559 = vmatpush1.msra.mxu0 0.0
    %1560 = vmatprep.subr.mxu0 0.0
    %1561 = vmatpush1.msra.mxu0 %v1525
    %1562 = vmatprep.subr.mxu0 0.0
    %1563 = vmatpush2.msra.mxu0 0.0
    %1564 = vmatprep.subr.mxu0 0.0
    %1565 = vmatpush2.msra.mxu0 0.0
    %1566 = vmatprep.subr.mxu0 0.0
    %1567 = vmatpush2.msra.mxu0 0.0
    %1568 = vmatprep.subr.mxu0 0.0
    %1569 = vmatpush2.msra.mxu0 0.0
    %1570 = vmatprep.subr.mxu0 0.0
    %1571 = vmatpush2.msra.mxu0 0.0
    %1572 = vmatprep.subr.mxu0 0.0
    %1573 = vmatpush2.msra.mxu0 0.0
    %1574 = vmatprep.subr.mxu0 0.0
    %1575 = vmatpush2.msra.mxu0 0.0
    %1576 = vmatprep.subr.mxu0 0.0
    %1577 = vmatpush2.msra.mxu0 0.0
    %1578 = vmatprep.subr.mxu0 0.0
    %1579 = vmatpush2.msra.mxu0 0.0
    %1580 = vmatprep.subr.mxu0 0.0
    %1581 = vmatpush2.msra.mxu0 0.0
    %1582 = vmatprep.subr.mxu0 0.0
    %1583 = vmatpush2.msra.mxu0 0.0
    %1584 = vmatprep.subr.mxu0 0.0
    %1585 = vmatpush2.msra.mxu0 0.0
    %1586 = vmatprep.subr.mxu0 0.0
    %1587 = vmatpush2.msra.mxu0 0.0
    %1588 = vmatprep.subr.mxu0 0.0
    %1589 = vmatpush2.msra.mxu0 0.0
    %1590 = vmatprep.subr.mxu0 0.0
    %1591 = vmatpush2.msra.mxu0 0.0
    %1592 = vmatprep.subr.mxu0 0.0
    %1593 = vmatpush2.msra.mxu0 0.0
    %1594 = vmatprep.mubr.f32.mxu0 0.0
    %1595 = vmatmul.mubr.f32.gmra.mxu0 %v1528
    %v1596 = vpop.f32.mrf.mxu0
    %v1597 = vadd.f32 0.0, %v1596
    %v1598 = vpop.f32.mrf.mxu0
    %1599 = vdwg.mxu0
    %1600 = vrot.lane.b32.xlu0 %v360, 104
    %v1601 = vpop.permute.xlu0 %1600
    %v1604 = vsel %vm363, %v1523, 0
    %1606 = vmatprep.subr.mxu0 0.0
    %1607 = vmatpush1.msra.mxu0 0.0
    %1608 = vmatprep.subr.mxu0 0.0
    %1609 = vmatpush1.msra.mxu0 0.0
    %1610 = vmatprep.subr.mxu0 0.0
    %1611 = vmatpush1.msra.mxu0 0.0
    %1612 = vmatprep.subr.mxu0 0.0
    %1613 = vmatpush1.msra.mxu0 0.0
    %1614 = vmatprep.subr.mxu0 0.0
    %1615 = vmatpush1.msra.mxu0 0.0
    %1616 = vmatprep.subr.mxu0 0.0
    %1617 = vmatpush1.msra.mxu0 0.0
    %1618 = vmatprep.subr.mxu0 0.0
    %1619 = vmatpush1.msra.mxu0 0.0
    %1620 = vmatprep.subr.mxu0 0.0
    %1621 = vmatpush1.msra.mxu0 0.0
    %1622 = vmatprep.subr.mxu0 0.0
    %1623 = vmatpush1.msra.mxu0 0.0
    %1624 = vmatprep.subr.mxu0 0.0
    %1625 = vmatpush1.msra.mxu0 0.0
    %1626 = vmatprep.subr.mxu0 0.0
    %1627 = vmatpush1.msra.mxu0 0.0
    %1628 = vmatprep.subr.mxu0 0.0
    %1629 = vmatpush1.msra.mxu0 0.0
    %1630 = vmatprep.subr.mxu0 0.0
    %1631 = vmatpush1.msra.mxu0 0.0
    %1632 = vmatprep.subr.mxu0 0.0
    %1633 = vmatpush1.msra.mxu0 0.0
    %1634 = vmatprep.subr.mxu0 0.0
    %1635 = vmatpush1.msra.mxu0 0.0
    %1636 = vmatprep.subr.mxu0 0.0
    %1637 = vmatpush1.msra.mxu0 %v1601
    %1638 = vmatprep.subr.mxu0 0.0
    %1639 = vmatpush2.msra.mxu0 0.0
    %1640 = vmatprep.subr.mxu0 0.0
    %1641 = vmatpush2.msra.mxu0 0.0
    %1642 = vmatprep.subr.mxu0 0.0
    %1643 = vmatpush2.msra.mxu0 0.0
    %1644 = vmatprep.subr.mxu0 0.0
    %1645 = vmatpush2.msra.mxu0 0.0
    %1646 = vmatprep.subr.mxu0 0.0
    %1647 = vmatpush2.msra.mxu0 0.0
    %1648 = vmatprep.subr.mxu0 0.0
    %1649 = vmatpush2.msra.mxu0 0.0
    %1650 = vmatprep.subr.mxu0 0.0
    %1651 = vmatpush2.msra.mxu0 0.0
    %1652 = vmatprep.subr.mxu0 0.0
    %1653 = vmatpush2.msra.mxu0 0.0
    %1654 = vmatprep.subr.mxu0 0.0
    %1655 = vmatpush2.msra.mxu0 0.0
    %1656 = vmatprep.subr.mxu0 0.0
    %1657 = vmatpush2.msra.mxu0 0.0
    %1658 = vmatprep.subr.mxu0 0.0
    %1659 = vmatpush2.msra.mxu0 0.0
    %1660 = vmatprep.subr.mxu0 0.0
    %1661 = vmatpush2.msra.mxu0 0.0
    %1662 = vmatprep.subr.mxu0 0.0
    %1663 = vmatpush2.msra.mxu0 0.0
    %1664 = vmatprep.subr.mxu0 0.0
    %1665 = vmatpush2.msra.mxu0 0.0
    %1666 = vmatprep.subr.mxu0 0.0
    %1667 = vmatpush2.msra.mxu0 0.0
    %1668 = vmatprep.subr.mxu0 0.0
    %1669 = vmatpush2.msra.mxu0 0.0
    %1670 = vmatprep.mubr.f32.mxu0 0.0
    %1671 = vmatmul.mubr.f32.gmra.mxu0 %v1604
    %v1672 = vpop.f32.mrf.mxu0
    %v1673 = vadd.f32 0.0, %v1672
    %v1674 = vpop.f32.mrf.mxu0
    %1675 = vdwg.mxu0
    %1678 = vrot.lane.b32.xlu0 %v936, 8
    %v1679 = vpop.permute.xlu0 %1678
    %1680 = vrot.lane.b32.xlu0 %v1013, 8
    %v1681 = vpop.permute.xlu0 %1680
    %1686 = vrot.lane.b32.xlu0 %v1267, 16
    %v1687 = vpop.permute.xlu0 %1686
    %1688 = vrot.lane.b32.xlu0 %v1343, 16
    %v1689 = vpop.permute.xlu0 %1688
    %1694 = vrot.lane.b32.xlu0 %v1597, 24
    %v1695 = vpop.permute.xlu0 %1694
    %1696 = vrot.lane.b32.xlu0 %v1673, 24
    %v1697 = vpop.permute.xlu0 %1696
    %v1700 = vsel %vm363, %v608, %v1679
    %v1701 = vsel %vm363, %v681, %v1681
    %vm1702 = vcmask 130048
    %v1703 = vsel %vm1702, %v1700, %v1687
    %v1704 = vsel %vm1702, %v1701, %v1689
    %vm1705 = vcmask 195584
    %v1706 = vsel %vm1705, %v1703, %v1695
    %v1707 = vsel %vm1705, %v1704, %v1697
    %v1708 = vld [vmem:[#allocation11] sm:$0xff]
    %v1709 = vld [vmem:[#allocation11 + $0x8] sm:$0xff]
    %v1710 = vld [vmem:[#allocation11 + $0x10] sm:$0xff]
    %v1711 = vld [vmem:[#allocation11 + $0x18] sm:$0xff]
    %v1712 = vld [vmem:[%s6] sm:$0x1]
    %v1714 = vlaneseq
    %v1715 = vshrl.u32 %v1714, 7
    %v1716 = vsub.s32 0, %v1715
    %v1717 = vrot.slane %v1712, %v1716
    %v1720 = vsel %vm117, %v1706, 0
    %v1723 = vsel %vm117, %v1707, 0
    %1725 = vmatprep.subr.mxu0 0.0
    %1726 = vmatpush1.msra.mxu0 0.0
    %1727 = vmatprep.subr.mxu0 0.0
    %1728 = vmatpush1.msra.mxu0 0.0
    %1729 = vmatprep.subr.mxu0 0.0
    %1730 = vmatpush1.msra.mxu0 0.0
    %1731 = vmatprep.subr.mxu0 0.0
    %1732 = vmatpush1.msra.mxu0 0.0
    %1733 = vmatprep.subr.mxu0 0.0
    %1734 = vmatpush1.msra.mxu0 0.0
    %1735 = vmatprep.subr.mxu0 0.0
    %1736 = vmatpush1.msra.mxu0 0.0
    %1737 = vmatprep.subr.mxu0 0.0
    %1738 = vmatpush1.msra.mxu0 0.0
    %1739 = vmatprep.subr.mxu0 0.0
    %1740 = vmatpush1.msra.mxu0 0.0
    %1741 = vmatprep.subr.mxu0 0.0
    %1742 = vmatpush1.msra.mxu0 0.0
    %1743 = vmatprep.subr.mxu0 0.0
    %1744 = vmatpush1.msra.mxu0 0.0
    %1745 = vmatprep.subr.mxu0 0.0
    %1746 = vmatpush1.msra.mxu0 0.0
    %1747 = vmatprep.subr.mxu0 0.0
    %1748 = vmatpush1.msra.mxu0 0.0
    %1749 = vmatprep.subr.mxu0 0.0
    %1750 = vmatpush1.msra.mxu0 %v1711
    %1751 = vmatprep.subr.mxu0 0.0
    %1752 = vmatpush1.msra.mxu0 %v1710
    %1753 = vmatprep.subr.mxu0 0.0
    %1754 = vmatpush1.msra.mxu0 %v1709
    %1755 = vmatprep.subr.mxu0 0.0
    %1756 = vmatpush1.msra.mxu0 %v1708
    %1757 = vmatprep.subr.mxu0 0.0
    %1758 = vmatpush2.msra.mxu0 0.0
    %1759 = vmatprep.subr.mxu0 0.0
    %1760 = vmatpush2.msra.mxu0 0.0
    %1761 = vmatprep.subr.mxu0 0.0
    %1762 = vmatpush2.msra.mxu0 0.0
    %1763 = vmatprep.subr.mxu0 0.0
    %1764 = vmatpush2.msra.mxu0 0.0
    %1765 = vmatprep.subr.mxu0 0.0
    %1766 = vmatpush2.msra.mxu0 0.0
    %1767 = vmatprep.subr.mxu0 0.0
    %1768 = vmatpush2.msra.mxu0 0.0
    %1769 = vmatprep.subr.mxu0 0.0
    %1770 = vmatpush2.msra.mxu0 0.0
    %1771 = vmatprep.subr.mxu0 0.0
    %1772 = vmatpush2.msra.mxu0 0.0
    %1773 = vmatprep.subr.mxu0 0.0
    %1774 = vmatpush2.msra.mxu0 0.0
    %1775 = vmatprep.subr.mxu0 0.0
    %1776 = vmatpush2.msra.mxu0 0.0
    %1777 = vmatprep.subr.mxu0 0.0
    %1778 = vmatpush2.msra.mxu0 0.0
    %1779 = vmatprep.subr.mxu0 0.0
    %1780 = vmatpush2.msra.mxu0 0.0
    %1781 = vmatprep.subr.mxu0 0.0
    %1782 = vmatpush2.msra.mxu0 0.0
    %1783 = vmatprep.subr.mxu0 0.0
    %1784 = vmatpush2.msra.mxu0 0.0
    %1785 = vmatprep.subr.mxu0 0.0
    %1786 = vmatpush2.msra.mxu0 0.0
    %1787 = vmatprep.subr.mxu0 0.0
    %1788 = vmatpush2.msra.mxu0 0.0
    %1789 = vmatprep.mubr.f32.mxu0 0.0
    %1790 = vmatmul.mubr.f32.gmra.mxu0 %v1720
    %v1791 = vpop.f32.mrf.mxu0
    %v1792 = vadd.f32 %v1717, %v1791
    %v1793 = vpop.f32.mrf.mxu0
    %1794 = vmatprep.mubr.f32.mxu0 0.0
    %1795 = vmatmul.mubr.f32.gmra.mxu0 %v1723
    %v1796 = vpop.f32.mrf.mxu0
    %v1797 = vadd.f32 %v1717, %v1796
    %v1798 = vpop.f32.mrf.mxu0
    %1799 = vdwg.mxu0
    %1800 = vst.msk [vmem:[#allocation13] sm:$0xff] %vm117, %v1792
    %1801 = vst.msk [vmem:[#allocation13 + $0x8] sm:$0xff] %vm117, %v1797
    // Predicated region
    $region54: #{tpu_custom_call.1} parent=1 // pred_check
      _
    $region55: #{tpu_custom_call.1} parent=1 // pred_check_branch
      %1803 = sbr.rel (0) target = $region57
    $region56: #{tpu_custom_call.1} parent=1 // pred_region
      %s1805 = ssub.s32 256, 256
      %1806 = vsyncadd [#allocation4], %s1805
      %s1807 = sshll.u32 [#allocation13], 4
      %s1808 = int_to_ptr.vmem [resolvable:$true] %s1807
      %1813 = dma.vmem_to_hbm [thread:$0]  %s1808, 256, %s7, [#allocation4], 128, 128, 8
    $region57: #{tpu_custom_call.1} parent=1 // pred_fallthru
      _
    // Predicated region
    $region58: #{tpu_custom_call.1} parent=1 // pred_check
      _
    $region59: #{tpu_custom_call.1} parent=1 // pred_check_branch
      %1815 = sbr.rel (0) target = $region61
    $region60: #{tpu_custom_call.1} parent=1 // pred_region
      %1816 = dma.done [#allocation4], 256
    $region61: #{tpu_custom_call.1} parent=1 // pred_fallthru
      _
    %1817 = vsyncpa [#allocation3], 1
    %1818 = vsyncpa [#allocation6], 1
    %1819 = vsyncpa [#allocation9], 1
    %1820 = vsyncpa [#allocation12], 1
    %1821 = vsyncpa [#allocation4], 1

</llo_original>
